<compile_context>
chip_gen: v7x
topology: tpu7x:2x2x1
jax: 0.10.0
libtpu: 0.0.40
codegen_flags: <defaults>
</compile_context>

<pallas_src>
import jax
import jax.numpy as jnp
from jax import lax
from jax.experimental import pallas as pl
from jax.experimental.pallas import tpu as pltpu

KH = KW = 3     # depthwise kernel size
PAD = 1
EPS = 1e-5      # PyTorch BatchNorm2d default
LANE = 128      # TPU lane width


def _round_up(x, m):
    return (x + m - 1) // m * m


def _compute_dtype():
    """bf16 staging on v6e/v7x (native bf16 VPU), f32 on v5x and older."""
    try:
        kind = jax.devices()[0].device_kind.lower()
    except Exception:
        return jnp.float32
    if any(t in kind for t in ("v2", "v3", "v4", "v5")):
        return jnp.float32
    return jnp.bfloat16


def _vmem_capacity_bytes():
    try:
        return int(pltpu.get_tpu_info().vmem_capacity_bytes)
    except Exception:
        return 64 * 1024 * 1024   # conservative: v7x per-TensorCore VMEM


def _tile_need_bytes(th, W, cin_p, cout_p, in_isz):
    """Honest per-step VMEM estimate: double-buffered pipeline buffers +
    double-buffered params + in-kernel temporaries."""
    Wp = W + 2 * PAD
    inp = 2 * (th + 2 * PAD) * Wp * cin_p * in_isz          # x slab, double-buffered
    out = 2 * th * W * cout_p * 4                            # f32 output, double-buffered
    wts = 2 * (cin_p * cout_p * 2                            # bf16 pointwise weights
               + KH * KW * cin_p * in_isz                    # depthwise taps
               + cin_p * in_isz + cout_p * 4)                # biases
    tmp = (th * W * cin_p * (in_isz + 2)                     # depthwise acc + bf16 copy of y
           + th * W * cout_p * 4)                            # f32 matmul result
    return inp + out + wts + tmp


def _pick_tile_h(H, W, cin_p, cout_p, in_isz, budget, min_row_tiles=1):
    """Largest divisor of H whose per-step VMEM need fits the budget and that
    yields at least `min_row_tiles` row tiles (for megacore sharding)."""
    for th in range(H, 0, -1):
        if H % th:
            continue
        if H // th >= min_row_tiles and _tile_need_bytes(th, W, cin_p, cout_p, in_isz) <= budget:
            return th
    for th in range(H, 0, -1):   # drop the min-tiles preference
        if H % th == 0 and _tile_need_bytes(th, W, cin_p, cout_p, in_isz) <= budget:
            return th
    return 1


def _dsc_kernel(x_ref, wdw_ref, b1_ref, wpw_ref, b2_ref, o_ref):
    """One (batch, row-tile) slab per grid step.

    x_ref  : (1, TILE_H+2, W+2, Cin_p)  zero-padded (spatial + channel) input slab
    wdw_ref: (KH*KW, Cin_p)             depthwise taps with BN1 scale folded in
    b1_ref : (1, Cin_p)                 folded BN1 bias (0 on padded channels)
    wpw_ref: (Cin_p, Cout_p)            pointwise weights with BN2 scale folded (bf16)
    b2_ref : (1, Cout_p)                folded BN2 bias (f32)
    o_ref  : (1, TILE_H, W, Cout_p)     lane-dense output slab
    """
    tile_h = o_ref.shape[1]
    W = o_ref.shape[2]
    cin_p = x_ref.shape[3]
    cout_p = o_ref.shape[3]

    wdw = wdw_ref[...]                         # (KH*KW, Cin_p)

    # ---- depthwise 3x3, stride 1 (VPU). Taps are read straight from the ref
    #      (no materialized shifted slabs); acc is initialized from tap 0. ----
    acc = None
    for di in range(KH):
        for dj in range(KW):
            tap = x_ref[0, di:di + tile_h, dj:dj + W, :] * wdw[di * KW + dj]
            acc = tap if acc is None else acc + tap

    # ---- BN1 (scale pre-folded into taps) bias + ReLU; padded channels stay 0 ----
    y = jnp.maximum(acc + b1_ref[...], 0.0)    # (TILE_H, W, Cin_p)

    # ---- pointwise 1x1 conv == channel matmul (MXU, bf16 in / f32 acc) ----
    y2 = jnp.dot(
        y.reshape(tile_h * W, cin_p).astype(jnp.bfloat16),
        wpw_ref[...],
        preferred_element_type=jnp.float32,
    )                                          # (TILE_H*W, Cout_p)

    # ---- BN2 (scale pre-folded into wpw) bias + ReLU ----
    y2 = jnp.maximum(y2 + b2_ref[...], 0.0)

    o_ref[...] = y2.reshape(1, tile_h, W, cout_p).astype(o_ref.dtype)


def depthwise_separable_conv(x_nchw, w_dw, w_pw,
                             gamma1, beta1, mean1, var1,
                             gamma2, beta2, mean2, var2):
    """x_nchw: (N, Cin, H, W); w_dw: (Cin, 1, KH, KW); w_pw: (Cout, Cin, 1, 1)."""
    N, Cin, H, W = x_nchw.shape
    Cout = w_pw.shape[0]
    Cin_p = _round_up(Cin, LANE)
    Cout_p = _round_up(Cout, LANE)
    Wp = W + 2 * PAD

    cdt = _compute_dtype()
    in_isz = jnp.dtype(cdt).itemsize

    # ---- fold BN (eval mode): scale into weights (in f32), keep only biases ----
    inv1 = lax.rsqrt(var1.astype(jnp.float32) + EPS)
    s1 = gamma1.astype(jnp.float32) * inv1
    b1 = beta1.astype(jnp.float32) - mean1.astype(jnp.float32) * s1

    inv2 = lax.rsqrt(var2.astype(jnp.float32) + EPS)
    s2 = gamma2.astype(jnp.float32) * inv2
    b2 = beta2.astype(jnp.float32) - mean2.astype(jnp.float32) * s2

    # depthwise taps: (KH*KW, Cin_p), BN1 scale folded per channel (f32 fold)
    wdw = jnp.transpose(w_dw[:, 0, :, :], (1, 2, 0)).reshape(KH * KW, Cin)
    wdw = (wdw.astype(jnp.float32) * s1[None, :])
    wdw = jnp.pad(wdw, ((0, 0), (0, Cin_p - Cin))).astype(cdt)
    b1p = jnp.pad(b1, (0, Cin_p - Cin)).reshape(1, Cin_p).astype(cdt)

    # pointwise weights: (Cin_p, Cout_p), BN2 scale folded into columns (f32),
    # then cast once to bf16 for the MXU
    wpw = jnp.transpose(w_pw[:, :, 0, 0], (1, 0)).astype(jnp.float32) * s2[None, :]
    wpw = jnp.pad(wpw, ((0, Cin_p - Cin), (0, Cout_p - Cout))).astype(jnp.bfloat16)
    b2p = jnp.pad(b2, (0, Cout_p - Cout)).reshape(1, Cout_p).astype(jnp.float32)

    # ---- layout glue (single fused XLA copy): NCHW -> NHWC, stage in the
    #      compute dtype, pad 1 px spatially and channels to a lane multiple ----
    x = jnp.transpose(x_nchw, (0, 2, 3, 1)).astype(cdt)
    x = jnp.pad(x, ((0, 0), (PAD, PAD), (PAD, PAD), (0, Cin_p - Cin)))

    # ---- generation-aware tile / VMEM sizing ----
    vmem_cap = _vmem_capacity_bytes()
    vmem_limit = (vmem_cap * 3) // 4                     # 48 MiB on v7x, 96 MiB on v5e/v6e
    budget = (vmem_limit * 4) // 5
    min_row_tiles = 1 if N >= 2 else min(2, H)           # keep >=2 grid steps for megacore
    tile_h = _pick_tile_h(H, W, Cin_p, Cout_p, in_isz, budget, min_row_tiles)
    num_th = H // tile_h
    vmem_limit = int(min(vmem_cap,
                         max(vmem_limit,
                             _tile_need_bytes(tile_h, W, Cin_p, Cout_p, in_isz) + (8 << 20))))

    # ---- input spec: overlapping row windows DMA'd directly from the padded
    #      input (no halo-duplication copy).  With a single row tile the block
    #      covers the whole (H+2) extent, so plain Blocked indexing is used. ----
    if num_th == 1:
        x_spec = pl.BlockSpec((1, H + 2 * PAD, Wp, Cin_p), lambda n, r: (n, 0, 0, 0))
    else:
        x_spec = pl.BlockSpec((1, pl.Element(tile_h + 2 * PAD), Wp, Cin_p),
                              lambda n, r: (n, r * tile_h, 0, 0))

    out_nhwc = pl.pallas_call(
        _dsc_kernel,
        out_shape=jax.ShapeDtypeStruct((N, H, W, Cout_p), x_nchw.dtype),
        grid_spec=pltpu.PrefetchScalarGridSpec(
            num_scalar_prefetch=0,
            grid=(N, num_th),
            in_specs=[
                x_spec,
                pl.BlockSpec((KH * KW, Cin_p), lambda n, r: (0, 0)),
                pl.BlockSpec((1, Cin_p), lambda n, r: (0, 0)),
                pl.BlockSpec((Cin_p, Cout_p), lambda n, r: (0, 0)),
                pl.BlockSpec((1, Cout_p), lambda n, r: (0, 0)),
            ],
            out_specs=pl.BlockSpec((1, tile_h, W, Cout_p), lambda n, r: (n, r, 0, 0)),
        ),
        compiler_params=pltpu.CompilerParams(
            dimension_semantics=("parallel", "parallel"),
            vmem_limit_bytes=vmem_limit,
        ),
    )(x, wdw, b1p, wpw, b2p)

    out = out_nhwc[..., :Cout]                  # drop padded channels
    return jnp.transpose(out, (0, 3, 1, 2))     # back to NCHW (module interface)


def _reference(x_nchw, w_dw, w_pw, gamma1, beta1, mean1, var1,
               gamma2, beta2, mean2, var2):
    """Pure-JAX f32 reference (NCHW convs, eval-mode BN) for correctness checking."""
    Cin = x_nchw.shape[1]
    y = lax.conv_general_dilated(
        x_nchw, w_dw, window_strides=(1, 1), padding=((PAD, PAD), (PAD, PAD)),
        dimension_numbers=("NCHW", "OIHW", "NCHW"), feature_group_count=Cin)
    y = (y - mean1[None, :, None, None]) / jnp.sqrt(var1[None, :, None, None] + EPS)
    y = y * gamma1[None, :, None, None] + beta1[None, :, None, None]
    y = jnp.maximum(y, 0.0)
    y = lax.conv_general_dilated(
        y, w_pw, window_strides=(1, 1), padding="VALID",
        dimension_numbers=("NCHW", "OIHW", "NCHW"))
    y = (y - mean2[None, :, None, None]) / jnp.sqrt(var2[None, :, None, None] + EPS)
    y = y * gamma2[None, :, None, None] + beta2[None, :, None, None]
    return jnp.maximum(y, 0.0)


if __name__ == "__main__":
    N, Cin, Cout, H, W = 2, 4, 8, 16, 16

    key = jax.random.PRNGKey(0)
    k1, k2, k3 = jax.random.split(key, 3)

    x = jax.random.normal(k1, (N, Cin, H, W), jnp.float32)
    w_dw = jax.random.normal(k2, (Cin, 1, KH, KW), jnp.float32) * (1.0 / (KH * KW) ** 0.5)
    w_pw = jax.random.normal(k3, (Cout, Cin, 1, 1), jnp.float32) * (1.0 / Cin ** 0.5)

    # mildly non-trivial BN params to exercise the folded affine path
    gamma1 = jnp.linspace(0.9, 1.1, Cin).astype(jnp.float32)
    beta1 = jnp.linspace(-0.1, 0.1, Cin).astype(jnp.float32)
    mean1 = jnp.linspace(-0.05, 0.05, Cin).astype(jnp.float32)
    var1 = jnp.linspace(0.9, 1.1, Cin).astype(jnp.float32)
    gamma2 = jnp.linspace(0.9, 1.1, Cout).astype(jnp.float32)
    beta2 = jnp.linspace(-0.1, 0.1, Cout).astype(jnp.float32)
    mean2 = jnp.linspace(-0.05, 0.05, Cout).astype(jnp.float32)
    var2 = jnp.linspace(0.9, 1.1, Cout).astype(jnp.float32)

    out = depthwise_separable_conv(x, w_dw, w_pw, gamma1, beta1, mean1, var1,
                                   gamma2, beta2, mean2, var2)
    out = jax.block_until_ready(out)

    ref = _reference(x, w_dw, w_pw, gamma1, beta1, mean1, var1,
                     gamma2, beta2, mean2, var2)
    assert out.shape == (N, Cout, H, W)
    # tolerance accounts for bf16 MXU operands (and bf16 input staging on v6e/v7x)
    assert jnp.allclose(out, ref, atol=5e-2, rtol=5e-2), "mismatch vs reference"

    print("KERNEL_OK")
</pallas_src>

<mosaic_0001>
module attributes {stable_mosaic.version = 11 : i64} {
  func.func @_dsc_kernel(%arg0: i32, %arg1: i32, %arg2: memref<1x18x18x128xbf16, #tpu.memory_space<vmem>>, %arg3: memref<9x128xbf16, #tpu.memory_space<vmem>>, %arg4: memref<1x128xbf16, #tpu.memory_space<vmem>>, %arg5: memref<128x128xbf16, #tpu.memory_space<vmem>>, %arg6: memref<1x128xf32, #tpu.memory_space<vmem>>, %arg7: memref<1x16x16x128xf32, #tpu.memory_space<vmem>>) attributes {dimension_semantics = [#tpu.dimension_semantics<parallel>, #tpu.dimension_semantics<parallel>], iteration_bounds = array<i64: 2, 1>, scalar_prefetch = 0 : i64, scratch_operands = 0 : i64, tpu.core_type = #tpu.core_type<tc>, window_params = [{transform_indices = @transform_0, window_bounds = array<i64: 1, 18, 18, 128>}, {pipeline_mode = #tpu.pipeline_mode<synchronous>, transform_indices = @transform_1, window_bounds = array<i64: 9, 128>}, {pipeline_mode = #tpu.pipeline_mode<synchronous>, transform_indices = @transform_2, window_bounds = array<i64: 1, 128>}, {pipeline_mode = #tpu.pipeline_mode<synchronous>, transform_indices = @transform_3, window_bounds = array<i64: 128, 128>}, {pipeline_mode = #tpu.pipeline_mode<synchronous>, transform_indices = @transform_4, window_bounds = array<i64: 1, 128>}, {transform_indices = @transform_5, window_bounds = array<i64: 1, 16, 16, 128>}]} {
    %c0 = arith.constant 0 : index
    %c0_0 = arith.constant 0 : index
    %0 = vector.load %arg3[%c0, %c0_0] : memref<9x128xbf16, #tpu.memory_space<vmem>>, vector<9x128xbf16>
    %c0_1 = arith.constant 0 : index
    %c0_2 = arith.constant 0 : index
    %c0_3 = arith.constant 0 : index
    %c0_4 = arith.constant 0 : index
    %1 = vector.load %arg2[%c0_1, %c0_2, %c0_3, %c0_4] : memref<1x18x18x128xbf16, #tpu.memory_space<vmem>>, vector<1x16x16x128xbf16>
    %2 = vector.shape_cast %1 : vector<1x16x16x128xbf16> to vector<16x16x128xbf16>
    %3 = vector.extract_strided_slice %0 {offsets = [0, 0], sizes = [1, 128], strides = [1, 1]} : vector<9x128xbf16> to vector<1x128xbf16>
    %4 = vector.shape_cast %3 : vector<1x128xbf16> to vector<128xbf16>
    %5 = vector.shape_cast %4 : vector<128xbf16> to vector<1x1x128xbf16>
    %6 = vector.broadcast %5 : vector<1x1x128xbf16> to vector<16x16x128xbf16>
    %7 = arith.mulf %2, %6 : vector<16x16x128xbf16>
    %c0_5 = arith.constant 0 : index
    %c0_6 = arith.constant 0 : index
    %c1 = arith.constant 1 : index
    %c0_7 = arith.constant 0 : index
    %8 = vector.load %arg2[%c0_5, %c0_6, %c1, %c0_7] : memref<1x18x18x128xbf16, #tpu.memory_space<vmem>>, vector<1x16x16x128xbf16>
    %9 = vector.shape_cast %8 : vector<1x16x16x128xbf16> to vector<16x16x128xbf16>
    %10 = vector.extract_strided_slice %0 {offsets = [1, 0], sizes = [1, 128], strides = [1, 1]} : vector<9x128xbf16> to vector<1x128xbf16>
    %11 = vector.shape_cast %10 : vector<1x128xbf16> to vector<128xbf16>
    %12 = vector.shape_cast %11 : vector<128xbf16> to vector<1x1x128xbf16>
    %13 = vector.broadcast %12 : vector<1x1x128xbf16> to vector<16x16x128xbf16>
    %14 = arith.mulf %9, %13 : vector<16x16x128xbf16>
    %15 = arith.addf %7, %14 : vector<16x16x128xbf16>
    %c0_8 = arith.constant 0 : index
    %c0_9 = arith.constant 0 : index
    %c2 = arith.constant 2 : index
    %c0_10 = arith.constant 0 : index
    %16 = vector.load %arg2[%c0_8, %c0_9, %c2, %c0_10] : memref<1x18x18x128xbf16, #tpu.memory_space<vmem>>, vector<1x16x16x128xbf16>
    %17 = vector.shape_cast %16 : vector<1x16x16x128xbf16> to vector<16x16x128xbf16>
    %18 = vector.extract_strided_slice %0 {offsets = [2, 0], sizes = [1, 128], strides = [1, 1]} : vector<9x128xbf16> to vector<1x128xbf16>
    %19 = vector.shape_cast %18 : vector<1x128xbf16> to vector<128xbf16>
    %20 = vector.shape_cast %19 : vector<128xbf16> to vector<1x1x128xbf16>
    %21 = vector.broadcast %20 : vector<1x1x128xbf16> to vector<16x16x128xbf16>
    %22 = arith.mulf %17, %21 : vector<16x16x128xbf16>
    %23 = arith.addf %15, %22 : vector<16x16x128xbf16>
    %c0_11 = arith.constant 0 : index
    %c1_12 = arith.constant 1 : index
    %c0_13 = arith.constant 0 : index
    %c0_14 = arith.constant 0 : index
    %24 = vector.load %arg2[%c0_11, %c1_12, %c0_13, %c0_14] : memref<1x18x18x128xbf16, #tpu.memory_space<vmem>>, vector<1x16x16x128xbf16>
    %25 = vector.shape_cast %24 : vector<1x16x16x128xbf16> to vector<16x16x128xbf16>
    %26 = vector.extract_strided_slice %0 {offsets = [3, 0], sizes = [1, 128], strides = [1, 1]} : vector<9x128xbf16> to vector<1x128xbf16>
    %27 = vector.shape_cast %26 : vector<1x128xbf16> to vector<128xbf16>
    %28 = vector.shape_cast %27 : vector<128xbf16> to vector<1x1x128xbf16>
    %29 = vector.broadcast %28 : vector<1x1x128xbf16> to vector<16x16x128xbf16>
    %30 = arith.mulf %25, %29 : vector<16x16x128xbf16>
    %31 = arith.addf %23, %30 : vector<16x16x128xbf16>
    %c0_15 = arith.constant 0 : index
    %c1_16 = arith.constant 1 : index
    %c1_17 = arith.constant 1 : index
    %c0_18 = arith.constant 0 : index
    %32 = vector.load %arg2[%c0_15, %c1_16, %c1_17, %c0_18] : memref<1x18x18x128xbf16, #tpu.memory_space<vmem>>, vector<1x16x16x128xbf16>
    %33 = vector.shape_cast %32 : vector<1x16x16x128xbf16> to vector<16x16x128xbf16>
    %34 = vector.extract_strided_slice %0 {offsets = [4, 0], sizes = [1, 128], strides = [1, 1]} : vector<9x128xbf16> to vector<1x128xbf16>
    %35 = vector.shape_cast %34 : vector<1x128xbf16> to vector<128xbf16>
    %36 = vector.shape_cast %35 : vector<128xbf16> to vector<1x1x128xbf16>
    %37 = vector.broadcast %36 : vector<1x1x128xbf16> to vector<16x16x128xbf16>
    %38 = arith.mulf %33, %37 : vector<16x16x128xbf16>
    %39 = arith.addf %31, %38 : vector<16x16x128xbf16>
    %c0_19 = arith.constant 0 : index
    %c1_20 = arith.constant 1 : index
    %c2_21 = arith.constant 2 : index
    %c0_22 = arith.constant 0 : index
    %40 = vector.load %arg2[%c0_19, %c1_20, %c2_21, %c0_22] : memref<1x18x18x128xbf16, #tpu.memory_space<vmem>>, vector<1x16x16x128xbf16>
    %41 = vector.shape_cast %40 : vector<1x16x16x128xbf16> to vector<16x16x128xbf16>
    %42 = vector.extract_strided_slice %0 {offsets = [5, 0], sizes = [1, 128], strides = [1, 1]} : vector<9x128xbf16> to vector<1x128xbf16>
    %43 = vector.shape_cast %42 : vector<1x128xbf16> to vector<128xbf16>
    %44 = vector.shape_cast %43 : vector<128xbf16> to vector<1x1x128xbf16>
    %45 = vector.broadcast %44 : vector<1x1x128xbf16> to vector<16x16x128xbf16>
    %46 = arith.mulf %41, %45 : vector<16x16x128xbf16>
    %47 = arith.addf %39, %46 : vector<16x16x128xbf16>
    %c0_23 = arith.constant 0 : index
    %c2_24 = arith.constant 2 : index
    %c0_25 = arith.constant 0 : index
    %c0_26 = arith.constant 0 : index
    %48 = vector.load %arg2[%c0_23, %c2_24, %c0_25, %c0_26] : memref<1x18x18x128xbf16, #tpu.memory_space<vmem>>, vector<1x16x16x128xbf16>
    %49 = vector.shape_cast %48 : vector<1x16x16x128xbf16> to vector<16x16x128xbf16>
    %50 = vector.extract_strided_slice %0 {offsets = [6, 0], sizes = [1, 128], strides = [1, 1]} : vector<9x128xbf16> to vector<1x128xbf16>
    %51 = vector.shape_cast %50 : vector<1x128xbf16> to vector<128xbf16>
    %52 = vector.shape_cast %51 : vector<128xbf16> to vector<1x1x128xbf16>
    %53 = vector.broadcast %52 : vector<1x1x128xbf16> to vector<16x16x128xbf16>
    %54 = arith.mulf %49, %53 : vector<16x16x128xbf16>
    %55 = arith.addf %47, %54 : vector<16x16x128xbf16>
    %c0_27 = arith.constant 0 : index
    %c2_28 = arith.constant 2 : index
    %c1_29 = arith.constant 1 : index
    %c0_30 = arith.constant 0 : index
    %56 = vector.load %arg2[%c0_27, %c2_28, %c1_29, %c0_30] : memref<1x18x18x128xbf16, #tpu.memory_space<vmem>>, vector<1x16x16x128xbf16>
    %57 = vector.shape_cast %56 : vector<1x16x16x128xbf16> to vector<16x16x128xbf16>
    %58 = vector.extract_strided_slice %0 {offsets = [7, 0], sizes = [1, 128], strides = [1, 1]} : vector<9x128xbf16> to vector<1x128xbf16>
    %59 = vector.shape_cast %58 : vector<1x128xbf16> to vector<128xbf16>
    %60 = vector.shape_cast %59 : vector<128xbf16> to vector<1x1x128xbf16>
    %61 = vector.broadcast %60 : vector<1x1x128xbf16> to vector<16x16x128xbf16>
    %62 = arith.mulf %57, %61 : vector<16x16x128xbf16>
    %63 = arith.addf %55, %62 : vector<16x16x128xbf16>
    %c0_31 = arith.constant 0 : index
    %c2_32 = arith.constant 2 : index
    %c2_33 = arith.constant 2 : index
    %c0_34 = arith.constant 0 : index
    %64 = vector.load %arg2[%c0_31, %c2_32, %c2_33, %c0_34] : memref<1x18x18x128xbf16, #tpu.memory_space<vmem>>, vector<1x16x16x128xbf16>
    %65 = vector.shape_cast %64 : vector<1x16x16x128xbf16> to vector<16x16x128xbf16>
    %66 = vector.extract_strided_slice %0 {offsets = [8, 0], sizes = [1, 128], strides = [1, 1]} : vector<9x128xbf16> to vector<1x128xbf16>
    %67 = vector.shape_cast %66 : vector<1x128xbf16> to vector<128xbf16>
    %68 = vector.shape_cast %67 : vector<128xbf16> to vector<1x1x128xbf16>
    %69 = vector.broadcast %68 : vector<1x1x128xbf16> to vector<16x16x128xbf16>
    %70 = arith.mulf %65, %69 : vector<16x16x128xbf16>
    %71 = arith.addf %63, %70 : vector<16x16x128xbf16>
    %c0_35 = arith.constant 0 : index
    %c0_36 = arith.constant 0 : index
    %72 = vector.load %arg4[%c0_35, %c0_36] : memref<1x128xbf16, #tpu.memory_space<vmem>>, vector<1x128xbf16>
    %73 = vector.shape_cast %72 : vector<1x128xbf16> to vector<1x1x128xbf16>
    %74 = vector.broadcast %73 : vector<1x1x128xbf16> to vector<16x16x128xbf16>
    %75 = arith.addf %71, %74 : vector<16x16x128xbf16>
    %cst = arith.constant 0.000000e+00 : bf16
    %76 = vector.broadcast %cst : bf16 to vector<16x16x128xbf16>
    %77 = arith.maximumf %75, %76 : vector<16x16x128xbf16>
    %78 = vector.shape_cast %77 : vector<16x16x128xbf16> to vector<256x128xbf16>
    %c0_37 = arith.constant 0 : index
    %c0_38 = arith.constant 0 : index
    %79 = vector.load %arg5[%c0_37, %c0_38] : memref<128x128xbf16, #tpu.memory_space<vmem>>, vector<128x128xbf16>
    %cst_39 = arith.constant dense<0.000000e+00> : vector<256x128xf32>
    %80 = tpu.matmul %78, %79, %cst_39 {dimension_numbers = #tpu.dot_dimension_numbers<[1], [0], [0], [1], [0, 0, 1, 1], [], []>} : vector<256x128xbf16>, vector<128x128xbf16>, vector<256x128xf32> -> vector<256x128xf32>
    %c0_40 = arith.constant 0 : index
    %c0_41 = arith.constant 0 : index
    %81 = vector.load %arg6[%c0_40, %c0_41] : memref<1x128xf32, #tpu.memory_space<vmem>>, vector<1x128xf32>
    %82 = vector.broadcast %81 : vector<1x128xf32> to vector<256x128xf32>
    %83 = arith.addf %80, %82 : vector<256x128xf32>
    %cst_42 = arith.constant 0.000000e+00 : f32
    %84 = vector.broadcast %cst_42 : f32 to vector<256x128xf32>
    %85 = arith.maximumf %83, %84 : vector<256x128xf32>
    %86 = vector.shape_cast %85 : vector<256x128xf32> to vector<1x16x16x128xf32>
    %c0_43 = arith.constant 0 : index
    %c0_44 = arith.constant 0 : index
    %c0_45 = arith.constant 0 : index
    %c0_46 = arith.constant 0 : index
    %87 = vector.load %arg7[%c0_43, %c0_44, %c0_45, %c0_46] : memref<1x16x16x128xf32, #tpu.memory_space<vmem>>, vector<1x16x16x128xf32>
    tpu.vector_store %arg7[%c0_43, %c0_44, %c0_45, %c0_46], %86 {strides = array<i32>} : memref<1x16x16x128xf32, #tpu.memory_space<vmem>>, vector<1x16x16x128xf32>,
    return
  }
  func.func @transform_0(%arg0: i32, %arg1: i32) -> (i32, i32, i32, i32) {
    %c0_i32 = arith.constant 0 : i32
    %c0_i32_0 = arith.constant 0 : i32
    %c0_i32_1 = arith.constant 0 : i32
    %c0_i32_2 = arith.constant 0 : i32
    return %arg0, %c0_i32, %c0_i32_0, %c0_i32_1 : i32, i32, i32, i32
  }
  func.func @transform_1(%arg0: i32, %arg1: i32) -> (i32, i32) {
    %c0_i32 = arith.constant 0 : i32
    %c0_i32_0 = arith.constant 0 : i32
    %c0_i32_1 = arith.constant 0 : i32
    return %c0_i32, %c0_i32_0 : i32, i32
  }
  func.func @transform_2(%arg0: i32, %arg1: i32) -> (i32, i32) {
    %c0_i32 = arith.constant 0 : i32
    %c0_i32_0 = arith.constant 0 : i32
    %c0_i32_1 = arith.constant 0 : i32
    return %c0_i32, %c0_i32_0 : i32, i32
  }
  func.func @transform_3(%arg0: i32, %arg1: i32) -> (i32, i32) {
    %c0_i32 = arith.constant 0 : i32
    %c0_i32_0 = arith.constant 0 : i32
    %c0_i32_1 = arith.constant 0 : i32
    return %c0_i32, %c0_i32_0 : i32, i32
  }
  func.func @transform_4(%arg0: i32, %arg1: i32) -> (i32, i32) {
    %c0_i32 = arith.constant 0 : i32
    %c0_i32_0 = arith.constant 0 : i32
    %c0_i32_1 = arith.constant 0 : i32
    return %c0_i32, %c0_i32_0 : i32, i32
  }
  func.func @transform_5(%arg0: i32, %arg1: i32) -> (i32, i32, i32, i32) {
    %c0_i32 = arith.constant 0 : i32
    %c0_i32_0 = arith.constant 0 : i32
    %c0_i32_1 = arith.constant 0 : i32
    return %arg0, %arg1, %c0_i32, %c0_i32_0 : i32, i32, i32, i32
  }
}

</mosaic_0001>

<llo_original>
// kernel: tpu_custom_call.1
$region0: #{tpu_custom_call.1}
  #allocation0 [shape = 'u32[]', space=smem, size = 0x4, offset = 0x4, fixed_abs, tag = 'smem constant byte address 0x4 - core index']
  #allocation1 [shape = 'u32[144,128]{1,0:T(1,128)}', space=vmem, size = 0x12000, scoped, tag = 'internal scratch']
  %s0 = inlined_call_operand.vmem [shape: bf16[2,18,18,128], index: 0, kind: input, shape index: {}]
  %s1 = inlined_call_operand.vmem [shape: bf16[9,128], index: 1, kind: input, shape index: {}]
  %s2 = inlined_call_operand.vmem [shape: bf16[1,128], index: 2, kind: input, shape index: {}]
  %s3 = inlined_call_operand.vmem [shape: bf16[128,128], index: 3, kind: input, shape index: {}]
  %s4 = inlined_call_operand.vmem [shape: f32[1,128], index: 4, kind: input, shape index: {}]
  %s5 = inlined_call_operand.hbm [shape: f32[2,16,16,128], index: 5, kind: output, shape index: {}]
  %s6 = sld [smem:[#allocation0]]
  $region53: #{tpu_custom_call.1} parent=0
    _
  %s8 = ssub.s32 1, %s6
  %s9 = scalar_select 0, %s8, %s6
  $region1: #{tpu_custom_call.1} parent=0
    #allocation2 [shape = 'u8[262144]{0}', space=vmem, size = 0x40000, scoped, tag = 'output window, operand 0']
    #allocation3 [shape = 's32[2]{0}', space=sflag, size = 0x8, scoped, tag = 'scoped memory for tpu_custom_call.1']
    %10 = vsyncpa [#allocation3], 0
    %s11 = scalar_lea.sflag [#allocation3], 1
    %12 = vsyncpa %s11, 0
    loop: start=0, step=1, limit=4
    $region2: #{tpu_custom_call.1} parent=1 // loop_pre_header
      _
    $region3: #{tpu_custom_call.1} parent=1 // loop_header
      %s14 = sphi 0, %s18
      %p15 = scmp.ge.s32.totalorder %s14, 4
      %s21 = sphi 0, %s33
      %s22 = sphi 0, %s29
      %s23 = sphi 0, %s21
      %s24 = sphi 0, %s22
      %s25 = sphi 0, %s23
      %s26 = sphi 0, %s24
      %s36 = sphi 0, %s38
      %s39 = sphi 0, %s36
      %s40 = sphi 0, %s39
      %s56 = sphi 0, %s40
      %s60 = sphi 0, %s60
      %s62 = sphi 0, %s60
      %s63 = sphi 0, %s62
      %s77 = sphi 0, %s63
      %s81 = sphi 0, %s81
      %s83 = sphi 0, %s81
      %s84 = sphi 0, %s83
      %s98 = sphi 0, %s84
      %s102 = sphi 0, %s102
      %s104 = sphi 0, %s102
      %s105 = sphi 0, %s104
      %s119 = sphi 0, %s105
      %s123 = sphi 0, %s123
      %s125 = sphi 0, %s123
      %s126 = sphi 0, %s125
      %s140 = sphi 0, %s126
      %s148 = sphi 0, %s150
      %s151 = sphi 0, %s148
      %s152 = sphi 0, %s151
      %s168 = sphi 0, %s152
    $region4: #{tpu_custom_call.1} parent=1 // loop_header_branch
      %17 = sbr.rel (%p15) target = $region8
    $region5: #{tpu_custom_call.1} parent=1 // loop_body
      %s19 = ssub.s32 %s14, 1
      %s20 = ssub.s32 %s14, 2
      %s27 = sadd.s32 1, %s22
      %p28 = scmp.ge.s32.totalorder %s27, 1
      %s29 = scalar_select %p28, 0, %s27
      %s30 = sadd.s32 1, %s21
      %s31 = scalar_select %p28, %s30, %s21
      %p32 = scmp.ge.s32.totalorder %s31, 2
      %s33 = scalar_select %p32, 0, %s31
      %s34 = ssub.s32 %s21, %s33
      %p35 = scmp.eq.s32.totalorder %s34, 0
      %s37 = sadd.s32 %s36, 1
      %s38 = scalar_select %p35, %s36, %s37
      %p41 = pneg %p35
      %p42 = scmp.eq.s32.totalorder %s14, 1
      %p43 = por %p41, %p42
      %p44 = scmp.ne.s32.totalorder %s36, %s39
      %p45 = scmp.eq.s32.totalorder %s14, 0
      %p46 = por %p44, %p45
      %p47 = scmp.ne.s32.totalorder %s36, %s39
      %p48 = scmp.eq.s32.totalorder %s19, 1
      %p49 = por %p47, %p48
      %p50 = scmp.ne.s32.totalorder %s39, %s40
      %p51 = scmp.eq.s32.totalorder %s19, 0
      %p52 = por %p50, %p51
      %p53 = scmp.ne.s32.totalorder %s39, %s40
      %p54 = scmp.eq.s32.totalorder %s20, 1
      %p55 = por %p53, %p54
      %p57 = scmp.ne.s32.totalorder %s40, %s56
      %p58 = scmp.eq.s32.totalorder %s20, 0
      %p59 = por %p57, %p58
      %s61 = sadd.s32 %s60, 1
      %p64 = scmp.eq.s32.totalorder %s14, 1
      %p65 = scmp.ne.s32.totalorder %s60, %s62
      %p66 = scmp.eq.s32.totalorder %s14, 0
      %p67 = por %p65, %p66
      %p68 = scmp.ne.s32.totalorder %s60, %s62
      %p69 = scmp.eq.s32.totalorder %s19, 1
      %p70 = por %p68, %p69
      %p71 = scmp.ne.s32.totalorder %s62, %s63
      %p72 = scmp.eq.s32.totalorder %s19, 0
      %p73 = por %p71, %p72
      %p74 = scmp.ne.s32.totalorder %s62, %s63
      %p75 = scmp.eq.s32.totalorder %s20, 1
      %p76 = por %p74, %p75
      %p78 = scmp.ne.s32.totalorder %s63, %s77
      %p79 = scmp.eq.s32.totalorder %s20, 0
      %p80 = por %p78, %p79
      %s82 = sadd.s32 %s81, 1
      %p85 = scmp.eq.s32.totalorder %s14, 1
      %p86 = scmp.ne.s32.totalorder %s81, %s83
      %p87 = scmp.eq.s32.totalorder %s14, 0
      %p88 = por %p86, %p87
      %p89 = scmp.ne.s32.totalorder %s81, %s83
      %p90 = scmp.eq.s32.totalorder %s19, 1
      %p91 = por %p89, %p90
      %p92 = scmp.ne.s32.totalorder %s83, %s84
      %p93 = scmp.eq.s32.totalorder %s19, 0
      %p94 = por %p92, %p93
      %p95 = scmp.ne.s32.totalorder %s83, %s84
      %p96 = scmp.eq.s32.totalorder %s20, 1
      %p97 = por %p95, %p96
      %p99 = scmp.ne.s32.totalorder %s84, %s98
      %p100 = scmp.eq.s32.totalorder %s20, 0
      %p101 = por %p99, %p100
      %s103 = sadd.s32 %s102, 1
      %p106 = scmp.eq.s32.totalorder %s14, 1
      %p107 = scmp.ne.s32.totalorder %s102, %s104
      %p108 = scmp.eq.s32.totalorder %s14, 0
      %p109 = por %p107, %p108
      %p110 = scmp.ne.s32.totalorder %s102, %s104
      %p111 = scmp.eq.s32.totalorder %s19, 1
      %p112 = por %p110, %p111
      %p113 = scmp.ne.s32.totalorder %s104, %s105
      %p114 = scmp.eq.s32.totalorder %s19, 0
      %p115 = por %p113, %p114
      %p116 = scmp.ne.s32.totalorder %s104, %s105
      %p117 = scmp.eq.s32.totalorder %s20, 1
      %p118 = por %p116, %p117
      %p120 = scmp.ne.s32.totalorder %s105, %s119
      %p121 = scmp.eq.s32.totalorder %s20, 0
      %p122 = por %p120, %p121
      %s124 = sadd.s32 %s123, 1
      %p127 = scmp.eq.s32.totalorder %s14, 1
      %p128 = scmp.ne.s32.totalorder %s123, %s125
      %p129 = scmp.eq.s32.totalorder %s14, 0
      %p130 = por %p128, %p129
      %p131 = scmp.ne.s32.totalorder %s123, %s125
      %p132 = scmp.eq.s32.totalorder %s19, 1
      %p133 = por %p131, %p132
      %p134 = scmp.ne.s32.totalorder %s125, %s126
      %p135 = scmp.eq.s32.totalorder %s19, 0
      %p136 = por %p134, %p135
      %p137 = scmp.ne.s32.totalorder %s125, %s126
      %p138 = scmp.eq.s32.totalorder %s20, 1
      %p139 = por %p137, %p138
      %p141 = scmp.ne.s32.totalorder %s126, %s140
      %p142 = scmp.eq.s32.totalorder %s20, 0
      %p143 = por %p141, %p142
      %s144 = ssub.s32 %s21, %s33
      %s145 = ssub.s32 %s22, %s29
      %s146 = sor.u32 %s144, %s145
      %p147 = scmp.eq.s32.totalorder %s146, 0
      %s149 = sadd.s32 %s148, 1
      %s150 = scalar_select %p147, %s148, %s149
      %p153 = pneg %p147
      %p154 = scmp.eq.s32.totalorder %s14, 1
      %p155 = por %p153, %p154
      %p156 = scmp.ne.s32.totalorder %s148, %s151
      %p157 = scmp.eq.s32.totalorder %s14, 0
      %p158 = por %p156, %p157
      %p159 = scmp.ne.s32.totalorder %s148, %s151
      %p160 = scmp.eq.s32.totalorder %s19, 1
      %p161 = por %p159, %p160
      %p162 = scmp.ne.s32.totalorder %s151, %s152
      %p163 = scmp.eq.s32.totalorder %s19, 0
      %p164 = por %p162, %p163
      %p165 = scmp.ne.s32.totalorder %s151, %s152
      %p166 = scmp.eq.s32.totalorder %s20, 1
      %p167 = por %p165, %p166
      %p169 = scmp.ne.s32.totalorder %s152, %s168
      %p170 = scmp.eq.s32.totalorder %s20, 0
      %p171 = por %p169, %p170
      %p172 = scmp.le.s32.totalorder 1, %s14
      %p173 = scmp.lt.s32.totalorder %s14, 3
      %p174 = pnand %p172, %p173
      %p175 = pneg %p174
      // Predicated region
      $region9: #{tpu_custom_call.1} parent=5 // pred_check
        _
      $region10: #{tpu_custom_call.1} parent=5 // pred_check_branch
        %177 = sbr.rel (%p174) target = $region12
      $region11: #{tpu_custom_call.1} parent=5 // pred_region
        %s178 = ssub.s32 %s14, 1
        // Predicated region
        $region13: #{tpu_custom_call.1} parent=11 // pred_check
          %p179 = pneg %p73
        $region14: #{tpu_custom_call.1} parent=11 // pred_check_branch
          %181 = sbr.rel (%p179) target = $region16
        $region15: #{tpu_custom_call.1} parent=11 // pred_region
          _
        $region16: #{tpu_custom_call.1} parent=11 // pred_fallthru
          _
        // Predicated region
        $region17: #{tpu_custom_call.1} parent=11 // pred_check
          %p182 = pneg %p94
        $region18: #{tpu_custom_call.1} parent=11 // pred_check_branch
          %184 = sbr.rel (%p182) target = $region20
        $region19: #{tpu_custom_call.1} parent=11 // pred_region
          _
        $region20: #{tpu_custom_call.1} parent=11 // pred_fallthru
          _
        // Predicated region
        $region21: #{tpu_custom_call.1} parent=11 // pred_check
          %p185 = pneg %p115
        $region22: #{tpu_custom_call.1} parent=11 // pred_check_branch
          %187 = sbr.rel (%p185) target = $region24
        $region23: #{tpu_custom_call.1} parent=11 // pred_region
          _
        $region24: #{tpu_custom_call.1} parent=11 // pred_fallthru
          _
        // Predicated region
        $region25: #{tpu_custom_call.1} parent=11 // pred_check
          %p188 = pneg %p136
        $region26: #{tpu_custom_call.1} parent=11 // pred_check_branch
          %190 = sbr.rel (%p188) target = $region28
        $region27: #{tpu_custom_call.1} parent=11 // pred_region
          _
        $region28: #{tpu_custom_call.1} parent=11 // pred_fallthru
          _
      $region12: #{tpu_custom_call.1} parent=5 // pred_fallthru
        _
      %p191 = scmp.lt.s32.totalorder %s14, 2
      // Predicated region
      $region29: #{tpu_custom_call.1} parent=5 // pred_check
        %p192 = pneg %p191
      $region30: #{tpu_custom_call.1} parent=5 // pred_check_branch
        %194 = sbr.rel (%p192) target = $region32
      $region31: #{tpu_custom_call.1} parent=5 // pred_region
        // Predicated region
        $region33: #{tpu_custom_call.1} parent=31 // pred_check
          %p195 = pneg %p46
        $region34: #{tpu_custom_call.1} parent=31 // pred_check_branch
          %197 = sbr.rel (%p195) target = $region36
        $region35: #{tpu_custom_call.1} parent=31 // pred_region
          %p198 = scmp.lt.s32.totalorder %s21, 1
          %s199 = scalar_select %p198, %s21, 1
          %s200 = smul.addr %s199, 54
          %s201 = smul.addr %s200, 4
          %s202 = scalar_lea.vmem %s0, %s201
        $region36: #{tpu_custom_call.1} parent=31 // pred_fallthru
          _
      $region32: #{tpu_custom_call.1} parent=5 // pred_fallthru
        _
      %p203 = scmp.le.s32.totalorder 1, %s14
      %p204 = scmp.lt.s32.totalorder %s14, 3
      %p205 = pnand %p203, %p204
      %p206 = pneg %p205
      // Predicated region
      $region37: #{tpu_custom_call.1} parent=5 // pred_check
        _
      $region38: #{tpu_custom_call.1} parent=5 // pred_check_branch
        %208 = sbr.rel (%p205) target = $region40
      $region39: #{tpu_custom_call.1} parent=5 // pred_region
        %s209 = ssub.s32 %s14, 1
        %p210 = scmp.lt.s32.totalorder %s23, 1
        %s211 = scalar_select %p210, %s23, 1
        %s212 = smul.addr %s211, 54
        %s213 = smul.addr %s212, 4
        %s214 = scalar_lea.vmem %s0, %s213
        %p215 = pneg %p52
        %p216 = pneg %p49
        %p217 = pneg %p73
        %p218 = pneg %p70
        %p219 = pneg %p94
        %p220 = pneg %p91
        %p221 = pneg %p115
        %p222 = pneg %p112
        %p223 = pneg %p136
        %p224 = pneg %p133
        %p225 = pneg %p164
        %p226 = pneg %p161
        %s227 = sand.u32 %s151, 1
        %s228 = scalar_lea.sflag [#allocation3], %s227
        %s229 = sand.u32 %s151, 1
        %s230 = smul.addr %s229, 256
        %s231 = scalar_lea.vmem [#allocation2], %s230
        %p232 = scmp.lt.s32.totalorder %s23, 1
        %s233 = scalar_select %p232, %s23, 1
        %s234 = smul.addr %s233, 54
        %s235 = smul.addr %s234, 4
        %s236 = scalar_lea.vmem %s0, %s235
        %s237 = smul.u32 16, %s24
        %v239 = vld [vmem:[%s1] sm:$0xf]
        %v240 = vld [vmem:[%s1 + $0x4] sm:$0x1]
        %v241 = vld [vmem:[%s236] sm:$0xf]
        %v242 = vld [vmem:[%s236 + $0x4] sm:$0xf]
        %v243 = vld [vmem:[%s236 + $0xc] sm:$0xf]
        %v244 = vld [vmem:[%s236 + $0x10] sm:$0xf]
        %v245 = vld [vmem:[%s236 + $0x18] sm:$0xf]
        %v246 = vld [vmem:[%s236 + $0x1c] sm:$0xf]
        %v247 = vld [vmem:[%s236 + $0x24] sm:$0xf]
        %v248 = vld [vmem:[%s236 + $0x28] sm:$0xf]
        %v249 = vld [vmem:[%s236 + $0x30] sm:$0xf]
        %v250 = vld [vmem:[%s236 + $0x34] sm:$0xf]
        %v251 = vld [vmem:[%s236 + $0x3c] sm:$0xf]
        %v252 = vld [vmem:[%s236 + $0x40] sm:$0xf]
        %v253 = vld [vmem:[%s236 + $0x48] sm:$0xf]
        %v254 = vld [vmem:[%s236 + $0x4c] sm:$0xf]
        %v255 = vld [vmem:[%s236 + $0x54] sm:$0xf]
        %v256 = vld [vmem:[%s236 + $0x58] sm:$0xf]
        %v257 = vld [vmem:[%s236 + $0x60] sm:$0xf]
        %v258 = vld [vmem:[%s236 + $0x64] sm:$0xf]
        %v259 = vld [vmem:[%s236 + $0x6c] sm:$0xf]
        %v260 = vld [vmem:[%s236 + $0x70] sm:$0xf]
        %v261 = vld [vmem:[%s236 + $0x78] sm:$0xf]
        %v262 = vld [vmem:[%s236 + $0x7c] sm:$0xf]
        %v263 = vld [vmem:[%s236 + $0x84] sm:$0xf]
        %v264 = vld [vmem:[%s236 + $0x88] sm:$0xf]
        %v265 = vld [vmem:[%s236 + $0x90] sm:$0xf]
        %v266 = vld [vmem:[%s236 + $0x94] sm:$0xf]
        %v267 = vld [vmem:[%s236 + $0x9c] sm:$0xf]
        %v268 = vld [vmem:[%s236 + $0xa0] sm:$0xf]
        %v269 = vld [vmem:[%s236 + $0xa8] sm:$0xf]
        %v270 = vld [vmem:[%s236 + $0xac] sm:$0xf]
        %v271 = vld [vmem:[%s236 + $0xb4] sm:$0xf]
        %v272 = vld [vmem:[%s236 + $0xb8] sm:$0xf]
        %v274 = vpack.i.b16 %v239, %v239
        %v276 = vlaneseq
        %v277 = vshrl.u32 %v276, 7
        %v278 = vsub.s32 0, %v277
        %v279 = vrot.slane %v274, %v278
        %v281 = vunpack.c.l.b16 %v279
        %v282 = vpack.c.b16 %v281, %v281
        %v284 = vmul.bf16 %v241, %v282
        %v285 = vmul.bf16 %v242, %v282
        %v286 = vmul.bf16 %v243, %v282
        %v287 = vmul.bf16 %v244, %v282
        %v288 = vmul.bf16 %v245, %v282
        %v289 = vmul.bf16 %v246, %v282
        %v290 = vmul.bf16 %v247, %v282
        %v291 = vmul.bf16 %v248, %v282
        %v292 = vmul.bf16 %v249, %v282
        %v293 = vmul.bf16 %v250, %v282
        %v294 = vmul.bf16 %v251, %v282
        %v295 = vmul.bf16 %v252, %v282
        %v296 = vmul.bf16 %v253, %v282
        %v297 = vmul.bf16 %v254, %v282
        %v298 = vmul.bf16 %v255, %v282
        %v299 = vmul.bf16 %v256, %v282
        %v300 = vmul.bf16 %v257, %v282
        %v301 = vmul.bf16 %v258, %v282
        %v302 = vmul.bf16 %v259, %v282
        %v303 = vmul.bf16 %v260, %v282
        %v304 = vmul.bf16 %v261, %v282
        %v305 = vmul.bf16 %v262, %v282
        %v306 = vmul.bf16 %v263, %v282
        %v307 = vmul.bf16 %v264, %v282
        %v308 = vmul.bf16 %v265, %v282
        %v309 = vmul.bf16 %v266, %v282
        %v310 = vmul.bf16 %v267, %v282
        %v311 = vmul.bf16 %v268, %v282
        %v312 = vmul.bf16 %v269, %v282
        %v313 = vmul.bf16 %v270, %v282
        %v314 = vmul.bf16 %v271, %v282
        %v315 = vmul.bf16 %v272, %v282
        %v316 = vld [vmem:[%s236 + $0x8] sm:$0x1]
        %v317 = vld [vmem:[%s236 + $0x14] sm:$0x1]
        %v318 = vld [vmem:[%s236 + $0x20] sm:$0x1]
        %v319 = vld [vmem:[%s236 + $0x2c] sm:$0x1]
        %v320 = vld [vmem:[%s236 + $0x38] sm:$0x1]
        %v321 = vld [vmem:[%s236 + $0x44] sm:$0x1]
        %v322 = vld [vmem:[%s236 + $0x50] sm:$0x1]
        %v323 = vld [vmem:[%s236 + $0x5c] sm:$0x1]
        %v324 = vld [vmem:[%s236 + $0x68] sm:$0x1]
        %v325 = vld [vmem:[%s236 + $0x74] sm:$0x1]
        %v326 = vld [vmem:[%s236 + $0x80] sm:$0x1]
        %v327 = vld [vmem:[%s236 + $0x8c] sm:$0x1]
        %v328 = vld [vmem:[%s236 + $0x98] sm:$0x1]
        %v329 = vld [vmem:[%s236 + $0xa4] sm:$0x1]
        %v330 = vld [vmem:[%s236 + $0xb0] sm:$0x1]
        %v331 = vld [vmem:[%s236 + $0xbc] sm:$0x1]
        %v332 = vshrl.u32 %v239, 16
        %v333 = vpack.i.b16 %v332, %v332
        %v335 = vlaneseq
        %v336 = vshrl.u32 %v335, 7
        %v337 = vsub.s32 0, %v336
        %v338 = vrot.slane %v333, %v337
        %v340 = vunpack.c.l.b16 %v338
        %v341 = vpack.c.b16 %v340, %v340
        %v343 = vmul.bf16 %v241, %v341
        %v344 = vmul.bf16 %v242, %v341
        %v345 = vmul.bf16 %v316, %v341
        %v346 = vmul.bf16 %v243, %v341
        %v347 = vmul.bf16 %v244, %v341
        %v348 = vmul.bf16 %v317, %v341
        %v349 = vmul.bf16 %v245, %v341
        %v350 = vmul.bf16 %v246, %v341
        %v351 = vmul.bf16 %v318, %v341
        %v352 = vmul.bf16 %v247, %v341
        %v353 = vmul.bf16 %v248, %v341
        %v354 = vmul.bf16 %v319, %v341
        %v355 = vmul.bf16 %v249, %v341
        %v356 = vmul.bf16 %v250, %v341
        %v357 = vmul.bf16 %v320, %v341
        %v358 = vmul.bf16 %v251, %v341
        %v359 = vmul.bf16 %v252, %v341
        %v360 = vmul.bf16 %v321, %v341
        %v361 = vmul.bf16 %v253, %v341
        %v362 = vmul.bf16 %v254, %v341
        %v363 = vmul.bf16 %v322, %v341
        %v364 = vmul.bf16 %v255, %v341
        %v365 = vmul.bf16 %v256, %v341
        %v366 = vmul.bf16 %v323, %v341
        %v367 = vmul.bf16 %v257, %v341
        %v368 = vmul.bf16 %v258, %v341
        %v369 = vmul.bf16 %v324, %v341
        %v370 = vmul.bf16 %v259, %v341
        %v371 = vmul.bf16 %v260, %v341
        %v372 = vmul.bf16 %v325, %v341
        %v373 = vmul.bf16 %v261, %v341
        %v374 = vmul.bf16 %v262, %v341
        %v375 = vmul.bf16 %v326, %v341
        %v376 = vmul.bf16 %v263, %v341
        %v377 = vmul.bf16 %v264, %v341
        %v378 = vmul.bf16 %v327, %v341
        %v379 = vmul.bf16 %v265, %v341
        %v380 = vmul.bf16 %v266, %v341
        %v381 = vmul.bf16 %v328, %v341
        %v382 = vmul.bf16 %v267, %v341
        %v383 = vmul.bf16 %v268, %v341
        %v384 = vmul.bf16 %v329, %v341
        %v385 = vmul.bf16 %v269, %v341
        %v386 = vmul.bf16 %v270, %v341
        %v387 = vmul.bf16 %v330, %v341
        %v388 = vmul.bf16 %v271, %v341
        %v389 = vmul.bf16 %v272, %v341
        %v390 = vmul.bf16 %v331, %v341
        %vm391 = vsmask.f32 3328
        %vm392 = vsmask.f32 7440
        %vm393 = vmor %vm391, %vm392
        %v395 = vshrl.u32 %v343, 16
        %v397 = vrot.slane %v395, 4
        %v398 = vshll.u32 %v343, 16
        %v400 = vrot.slane %v398, 5
        %v401 = vor.u32 %v397, %v400
        %v402 = vrot.slane %v401, 4
        %v404 = vshll.u32 %v344, 16
        %v406 = vrot.slane %v404, 5
        %v407 = vsel %vm393, %v402, %v406
        %v408 = vshrl.u32 %v344, 16
        %v410 = vrot.slane %v408, 4
        %v411 = vor.u32 %v410, %v406
        %v412 = vrot.slane %v411, 4
        %v414 = vshll.u32 %v345, 16
        %v416 = vrot.slane %v414, 5
        %v417 = vsel %vm393, %v412, %v416
        %v419 = vshrl.u32 %v346, 16
        %v421 = vrot.slane %v419, 4
        %v422 = vshll.u32 %v346, 16
        %v424 = vrot.slane %v422, 5
        %v425 = vor.u32 %v421, %v424
        %v426 = vrot.slane %v425, 4
        %v428 = vshll.u32 %v347, 16
        %v430 = vrot.slane %v428, 5
        %v431 = vsel %vm393, %v426, %v430
        %v432 = vshrl.u32 %v347, 16
        %v434 = vrot.slane %v432, 4
        %v435 = vor.u32 %v434, %v430
        %v436 = vrot.slane %v435, 4
        %v438 = vshll.u32 %v348, 16
        %v440 = vrot.slane %v438, 5
        %v441 = vsel %vm393, %v436, %v440
        %v443 = vshrl.u32 %v349, 16
        %v445 = vrot.slane %v443, 4
        %v446 = vshll.u32 %v349, 16
        %v448 = vrot.slane %v446, 5
        %v449 = vor.u32 %v445, %v448
        %v450 = vrot.slane %v449, 4
        %v452 = vshll.u32 %v350, 16
        %v454 = vrot.slane %v452, 5
        %v455 = vsel %vm393, %v450, %v454
        %v456 = vshrl.u32 %v350, 16
        %v458 = vrot.slane %v456, 4
        %v459 = vor.u32 %v458, %v454
        %v460 = vrot.slane %v459, 4
        %v462 = vshll.u32 %v351, 16
        %v464 = vrot.slane %v462, 5
        %v465 = vsel %vm393, %v460, %v464
        %v467 = vshrl.u32 %v352, 16
        %v469 = vrot.slane %v467, 4
        %v470 = vshll.u32 %v352, 16
        %v472 = vrot.slane %v470, 5
        %v473 = vor.u32 %v469, %v472
        %v474 = vrot.slane %v473, 4
        %v476 = vshll.u32 %v353, 16
        %v478 = vrot.slane %v476, 5
        %v479 = vsel %vm393, %v474, %v478
        %v480 = vshrl.u32 %v353, 16
        %v482 = vrot.slane %v480, 4
        %v483 = vor.u32 %v482, %v478
        %v484 = vrot.slane %v483, 4
        %v486 = vshll.u32 %v354, 16
        %v488 = vrot.slane %v486, 5
        %v489 = vsel %vm393, %v484, %v488
        %v491 = vshrl.u32 %v355, 16
        %v493 = vrot.slane %v491, 4
        %v494 = vshll.u32 %v355, 16
        %v496 = vrot.slane %v494, 5
        %v497 = vor.u32 %v493, %v496
        %v498 = vrot.slane %v497, 4
        %v500 = vshll.u32 %v356, 16
        %v502 = vrot.slane %v500, 5
        %v503 = vsel %vm393, %v498, %v502
        %v504 = vshrl.u32 %v356, 16
        %v506 = vrot.slane %v504, 4
        %v507 = vor.u32 %v506, %v502
        %v508 = vrot.slane %v507, 4
        %v510 = vshll.u32 %v357, 16
        %v512 = vrot.slane %v510, 5
        %v513 = vsel %vm393, %v508, %v512
        %v515 = vshrl.u32 %v358, 16
        %v517 = vrot.slane %v515, 4
        %v518 = vshll.u32 %v358, 16
        %v520 = vrot.slane %v518, 5
        %v521 = vor.u32 %v517, %v520
        %v522 = vrot.slane %v521, 4
        %v524 = vshll.u32 %v359, 16
        %v526 = vrot.slane %v524, 5
        %v527 = vsel %vm393, %v522, %v526
        %v528 = vshrl.u32 %v359, 16
        %v530 = vrot.slane %v528, 4
        %v531 = vor.u32 %v530, %v526
        %v532 = vrot.slane %v531, 4
        %v534 = vshll.u32 %v360, 16
        %v536 = vrot.slane %v534, 5
        %v537 = vsel %vm393, %v532, %v536
        %v539 = vshrl.u32 %v361, 16
        %v541 = vrot.slane %v539, 4
        %v542 = vshll.u32 %v361, 16
        %v544 = vrot.slane %v542, 5
        %v545 = vor.u32 %v541, %v544
        %v546 = vrot.slane %v545, 4
        %v548 = vshll.u32 %v362, 16
        %v550 = vrot.slane %v548, 5
        %v551 = vsel %vm393, %v546, %v550
        %v552 = vshrl.u32 %v362, 16
        %v554 = vrot.slane %v552, 4
        %v555 = vor.u32 %v554, %v550
        %v556 = vrot.slane %v555, 4
        %v558 = vshll.u32 %v363, 16
        %v560 = vrot.slane %v558, 5
        %v561 = vsel %vm393, %v556, %v560
        %v563 = vshrl.u32 %v364, 16
        %v565 = vrot.slane %v563, 4
        %v566 = vshll.u32 %v364, 16
        %v568 = vrot.slane %v566, 5
        %v569 = vor.u32 %v565, %v568
        %v570 = vrot.slane %v569, 4
        %v572 = vshll.u32 %v365, 16
        %v574 = vrot.slane %v572, 5
        %v575 = vsel %vm393, %v570, %v574
        %v576 = vshrl.u32 %v365, 16
        %v578 = vrot.slane %v576, 4
        %v579 = vor.u32 %v578, %v574
        %v580 = vrot.slane %v579, 4
        %v582 = vshll.u32 %v366, 16
        %v584 = vrot.slane %v582, 5
        %v585 = vsel %vm393, %v580, %v584
        %v587 = vshrl.u32 %v367, 16
        %v589 = vrot.slane %v587, 4
        %v590 = vshll.u32 %v367, 16
        %v592 = vrot.slane %v590, 5
        %v593 = vor.u32 %v589, %v592
        %v594 = vrot.slane %v593, 4
        %v596 = vshll.u32 %v368, 16
        %v598 = vrot.slane %v596, 5
        %v599 = vsel %vm393, %v594, %v598
        %v600 = vshrl.u32 %v368, 16
        %v602 = vrot.slane %v600, 4
        %v603 = vor.u32 %v602, %v598
        %v604 = vrot.slane %v603, 4
        %v606 = vshll.u32 %v369, 16
        %v608 = vrot.slane %v606, 5
        %v609 = vsel %vm393, %v604, %v608
        %v611 = vshrl.u32 %v370, 16
        %v613 = vrot.slane %v611, 4
        %v614 = vshll.u32 %v370, 16
        %v616 = vrot.slane %v614, 5
        %v617 = vor.u32 %v613, %v616
        %v618 = vrot.slane %v617, 4
        %v620 = vshll.u32 %v371, 16
        %v622 = vrot.slane %v620, 5
        %v623 = vsel %vm393, %v618, %v622
        %v624 = vshrl.u32 %v371, 16
        %v626 = vrot.slane %v624, 4
        %v627 = vor.u32 %v626, %v622
        %v628 = vrot.slane %v627, 4
        %v630 = vshll.u32 %v372, 16
        %v632 = vrot.slane %v630, 5
        %v633 = vsel %vm393, %v628, %v632
        %v635 = vshrl.u32 %v373, 16
        %v637 = vrot.slane %v635, 4
        %v638 = vshll.u32 %v373, 16
        %v640 = vrot.slane %v638, 5
        %v641 = vor.u32 %v637, %v640
        %v642 = vrot.slane %v641, 4
        %v644 = vshll.u32 %v374, 16
        %v646 = vrot.slane %v644, 5
        %v647 = vsel %vm393, %v642, %v646
        %v648 = vshrl.u32 %v374, 16
        %v650 = vrot.slane %v648, 4
        %v651 = vor.u32 %v650, %v646
        %v652 = vrot.slane %v651, 4
        %v654 = vshll.u32 %v375, 16
        %v656 = vrot.slane %v654, 5
        %v657 = vsel %vm393, %v652, %v656
        %v659 = vshrl.u32 %v376, 16
        %v661 = vrot.slane %v659, 4
        %v662 = vshll.u32 %v376, 16
        %v664 = vrot.slane %v662, 5
        %v665 = vor.u32 %v661, %v664
        %v666 = vrot.slane %v665, 4
        %v668 = vshll.u32 %v377, 16
        %v670 = vrot.slane %v668, 5
        %v671 = vsel %vm393, %v666, %v670
        %v672 = vshrl.u32 %v377, 16
        %v674 = vrot.slane %v672, 4
        %v675 = vor.u32 %v674, %v670
        %v676 = vrot.slane %v675, 4
        %v678 = vshll.u32 %v378, 16
        %v680 = vrot.slane %v678, 5
        %v681 = vsel %vm393, %v676, %v680
        %v683 = vshrl.u32 %v379, 16
        %v685 = vrot.slane %v683, 4
        %v686 = vshll.u32 %v379, 16
        %v688 = vrot.slane %v686, 5
        %v689 = vor.u32 %v685, %v688
        %v690 = vrot.slane %v689, 4
        %v692 = vshll.u32 %v380, 16
        %v694 = vrot.slane %v692, 5
        %v695 = vsel %vm393, %v690, %v694
        %v696 = vshrl.u32 %v380, 16
        %v698 = vrot.slane %v696, 4
        %v699 = vor.u32 %v698, %v694
        %v700 = vrot.slane %v699, 4
        %v702 = vshll.u32 %v381, 16
        %v704 = vrot.slane %v702, 5
        %v705 = vsel %vm393, %v700, %v704
        %v707 = vshrl.u32 %v382, 16
        %v709 = vrot.slane %v707, 4
        %v710 = vshll.u32 %v382, 16
        %v712 = vrot.slane %v710, 5
        %v713 = vor.u32 %v709, %v712
        %v714 = vrot.slane %v713, 4
        %v716 = vshll.u32 %v383, 16
        %v718 = vrot.slane %v716, 5
        %v719 = vsel %vm393, %v714, %v718
        %v720 = vshrl.u32 %v383, 16
        %v722 = vrot.slane %v720, 4
        %v723 = vor.u32 %v722, %v718
        %v724 = vrot.slane %v723, 4
        %v726 = vshll.u32 %v384, 16
        %v728 = vrot.slane %v726, 5
        %v729 = vsel %vm393, %v724, %v728
        %v731 = vshrl.u32 %v385, 16
        %v733 = vrot.slane %v731, 4
        %v734 = vshll.u32 %v385, 16
        %v736 = vrot.slane %v734, 5
        %v737 = vor.u32 %v733, %v736
        %v738 = vrot.slane %v737, 4
        %v740 = vshll.u32 %v386, 16
        %v742 = vrot.slane %v740, 5
        %v743 = vsel %vm393, %v738, %v742
        %v744 = vshrl.u32 %v386, 16
        %v746 = vrot.slane %v744, 4
        %v747 = vor.u32 %v746, %v742
        %v748 = vrot.slane %v747, 4
        %v750 = vshll.u32 %v387, 16
        %v752 = vrot.slane %v750, 5
        %v753 = vsel %vm393, %v748, %v752
        %v755 = vshrl.u32 %v388, 16
        %v757 = vrot.slane %v755, 4
        %v758 = vshll.u32 %v388, 16
        %v760 = vrot.slane %v758, 5
        %v761 = vor.u32 %v757, %v760
        %v762 = vrot.slane %v761, 4
        %v764 = vshll.u32 %v389, 16
        %v766 = vrot.slane %v764, 5
        %v767 = vsel %vm393, %v762, %v766
        %v768 = vshrl.u32 %v389, 16
        %v770 = vrot.slane %v768, 4
        %v771 = vor.u32 %v770, %v766
        %v772 = vrot.slane %v771, 4
        %v774 = vshll.u32 %v390, 16
        %v776 = vrot.slane %v774, 5
        %v777 = vsel %vm393, %v772, %v776
        %v810 = vadd.bf16 %v284, %v407
        %v811 = vadd.bf16 %v285, %v417
        %v812 = vadd.bf16 %v286, %v431
        %v813 = vadd.bf16 %v287, %v441
        %v814 = vadd.bf16 %v288, %v455
        %v815 = vadd.bf16 %v289, %v465
        %v816 = vadd.bf16 %v290, %v479
        %v817 = vadd.bf16 %v291, %v489
        %v818 = vadd.bf16 %v292, %v503
        %v819 = vadd.bf16 %v293, %v513
        %v820 = vadd.bf16 %v294, %v527
        %v821 = vadd.bf16 %v295, %v537
        %v822 = vadd.bf16 %v296, %v551
        %v823 = vadd.bf16 %v297, %v561
        %v824 = vadd.bf16 %v298, %v575
        %v825 = vadd.bf16 %v299, %v585
        %v826 = vadd.bf16 %v300, %v599
        %v827 = vadd.bf16 %v301, %v609
        %v828 = vadd.bf16 %v302, %v623
        %v829 = vadd.bf16 %v303, %v633
        %v830 = vadd.bf16 %v304, %v647
        %v831 = vadd.bf16 %v305, %v657
        %v832 = vadd.bf16 %v306, %v671
        %v833 = vadd.bf16 %v307, %v681
        %v834 = vadd.bf16 %v308, %v695
        %v835 = vadd.bf16 %v309, %v705
        %v836 = vadd.bf16 %v310, %v719
        %v837 = vadd.bf16 %v311, %v729
        %v838 = vadd.bf16 %v312, %v743
        %v839 = vadd.bf16 %v313, %v753
        %v840 = vadd.bf16 %v314, %v767
        %v841 = vadd.bf16 %v315, %v777
        %v842 = vld [vmem:[%s236] sm:$0xe]
        %v843 = vld [vmem:[%s236 + $0xc] sm:$0xe]
        %v844 = vld [vmem:[%s236 + $0x18] sm:$0xe]
        %v845 = vld [vmem:[%s236 + $0x24] sm:$0xe]
        %v846 = vld [vmem:[%s236 + $0x30] sm:$0xe]
        %v847 = vld [vmem:[%s236 + $0x3c] sm:$0xe]
        %v848 = vld [vmem:[%s236 + $0x48] sm:$0xe]
        %v849 = vld [vmem:[%s236 + $0x54] sm:$0xe]
        %v850 = vld [vmem:[%s236 + $0x60] sm:$0xe]
        %v851 = vld [vmem:[%s236 + $0x6c] sm:$0xe]
        %v852 = vld [vmem:[%s236 + $0x78] sm:$0xe]
        %v853 = vld [vmem:[%s236 + $0x84] sm:$0xe]
        %v854 = vld [vmem:[%s236 + $0x90] sm:$0xe]
        %v855 = vld [vmem:[%s236 + $0x9c] sm:$0xe]
        %v856 = vld [vmem:[%s236 + $0xa8] sm:$0xe]
        %v857 = vld [vmem:[%s236 + $0xb4] sm:$0xe]
        %v858 = vlaneseq
        %v859 = vshrl.u32 %v858, 7
        %v860 = vsub.s32 1, %v859
        %v861 = vrot.slane %v274, %v860
        %v863 = vunpack.c.l.b16 %v861
        %v864 = vpack.c.b16 %v863, %v863
        %v866 = vmul.bf16 %v842, %v864
        %v867 = vmul.bf16 %v242, %v864
        %v868 = vmul.bf16 %v316, %v864
        %v869 = vmul.bf16 %v843, %v864
        %v870 = vmul.bf16 %v244, %v864
        %v871 = vmul.bf16 %v317, %v864
        %v872 = vmul.bf16 %v844, %v864
        %v873 = vmul.bf16 %v246, %v864
        %v874 = vmul.bf16 %v318, %v864
        %v875 = vmul.bf16 %v845, %v864
        %v876 = vmul.bf16 %v248, %v864
        %v877 = vmul.bf16 %v319, %v864
        %v878 = vmul.bf16 %v846, %v864
        %v879 = vmul.bf16 %v250, %v864
        %v880 = vmul.bf16 %v320, %v864
        %v881 = vmul.bf16 %v847, %v864
        %v882 = vmul.bf16 %v252, %v864
        %v883 = vmul.bf16 %v321, %v864
        %v884 = vmul.bf16 %v848, %v864
        %v885 = vmul.bf16 %v254, %v864
        %v886 = vmul.bf16 %v322, %v864
        %v887 = vmul.bf16 %v849, %v864
        %v888 = vmul.bf16 %v256, %v864
        %v889 = vmul.bf16 %v323, %v864
        %v890 = vmul.bf16 %v850, %v864
        %v891 = vmul.bf16 %v258, %v864
        %v892 = vmul.bf16 %v324, %v864
        %v893 = vmul.bf16 %v851, %v864
        %v894 = vmul.bf16 %v260, %v864
        %v895 = vmul.bf16 %v325, %v864
        %v896 = vmul.bf16 %v852, %v864
        %v897 = vmul.bf16 %v262, %v864
        %v898 = vmul.bf16 %v326, %v864
        %v899 = vmul.bf16 %v853, %v864
        %v900 = vmul.bf16 %v264, %v864
        %v901 = vmul.bf16 %v327, %v864
        %v902 = vmul.bf16 %v854, %v864
        %v903 = vmul.bf16 %v266, %v864
        %v904 = vmul.bf16 %v328, %v864
        %v905 = vmul.bf16 %v855, %v864
        %v906 = vmul.bf16 %v268, %v864
        %v907 = vmul.bf16 %v329, %v864
        %v908 = vmul.bf16 %v856, %v864
        %v909 = vmul.bf16 %v270, %v864
        %v910 = vmul.bf16 %v330, %v864
        %v911 = vmul.bf16 %v857, %v864
        %v912 = vmul.bf16 %v272, %v864
        %v913 = vmul.bf16 %v331, %v864
        %vm962 = vcmask 1042432
        %vm963 = vcmask 1046532
        %vm964 = vmor %vm962, %vm963
        %v965 = vrot.slane %v866, 5
        %v966 = vrot.slane %v965, 4
        %v967 = vrot.slane %v867, 5
        %v968 = vsel %vm964, %v966, %v967
        %v969 = vrot.slane %v967, 4
        %v970 = vrot.slane %v868, 5
        %v971 = vsel %vm964, %v969, %v970
        %v972 = vrot.slane %v869, 5
        %v973 = vrot.slane %v972, 4
        %v974 = vrot.slane %v870, 5
        %v975 = vsel %vm964, %v973, %v974
        %v976 = vrot.slane %v974, 4
        %v977 = vrot.slane %v871, 5
        %v978 = vsel %vm964, %v976, %v977
        %v979 = vrot.slane %v872, 5
        %v980 = vrot.slane %v979, 4
        %v981 = vrot.slane %v873, 5
        %v982 = vsel %vm964, %v980, %v981
        %v983 = vrot.slane %v981, 4
        %v984 = vrot.slane %v874, 5
        %v985 = vsel %vm964, %v983, %v984
        %v986 = vrot.slane %v875, 5
        %v987 = vrot.slane %v986, 4
        %v988 = vrot.slane %v876, 5
        %v989 = vsel %vm964, %v987, %v988
        %v990 = vrot.slane %v988, 4
        %v991 = vrot.slane %v877, 5
        %v992 = vsel %vm964, %v990, %v991
        %v993 = vrot.slane %v878, 5
        %v994 = vrot.slane %v993, 4
        %v995 = vrot.slane %v879, 5
        %v996 = vsel %vm964, %v994, %v995
        %v997 = vrot.slane %v995, 4
        %v998 = vrot.slane %v880, 5
        %v999 = vsel %vm964, %v997, %v998
        %v1000 = vrot.slane %v881, 5
        %v1001 = vrot.slane %v1000, 4
        %v1002 = vrot.slane %v882, 5
        %v1003 = vsel %vm964, %v1001, %v1002
        %v1004 = vrot.slane %v1002, 4
        %v1005 = vrot.slane %v883, 5
        %v1006 = vsel %vm964, %v1004, %v1005
        %v1007 = vrot.slane %v884, 5
        %v1008 = vrot.slane %v1007, 4
        %v1009 = vrot.slane %v885, 5
        %v1010 = vsel %vm964, %v1008, %v1009
        %v1011 = vrot.slane %v1009, 4
        %v1012 = vrot.slane %v886, 5
        %v1013 = vsel %vm964, %v1011, %v1012
        %v1014 = vrot.slane %v887, 5
        %v1015 = vrot.slane %v1014, 4
        %v1016 = vrot.slane %v888, 5
        %v1017 = vsel %vm964, %v1015, %v1016
        %v1018 = vrot.slane %v1016, 4
        %v1019 = vrot.slane %v889, 5
        %v1020 = vsel %vm964, %v1018, %v1019
        %v1021 = vrot.slane %v890, 5
        %v1022 = vrot.slane %v1021, 4
        %v1023 = vrot.slane %v891, 5
        %v1024 = vsel %vm964, %v1022, %v1023
        %v1025 = vrot.slane %v1023, 4
        %v1026 = vrot.slane %v892, 5
        %v1027 = vsel %vm964, %v1025, %v1026
        %v1028 = vrot.slane %v893, 5
        %v1029 = vrot.slane %v1028, 4
        %v1030 = vrot.slane %v894, 5
        %v1031 = vsel %vm964, %v1029, %v1030
        %v1032 = vrot.slane %v1030, 4
        %v1033 = vrot.slane %v895, 5
        %v1034 = vsel %vm964, %v1032, %v1033
        %v1035 = vrot.slane %v896, 5
        %v1036 = vrot.slane %v1035, 4
        %v1037 = vrot.slane %v897, 5
        %v1038 = vsel %vm964, %v1036, %v1037
        %v1039 = vrot.slane %v1037, 4
        %v1040 = vrot.slane %v898, 5
        %v1041 = vsel %vm964, %v1039, %v1040
        %v1042 = vrot.slane %v899, 5
        %v1043 = vrot.slane %v1042, 4
        %v1044 = vrot.slane %v900, 5
        %v1045 = vsel %vm964, %v1043, %v1044
        %v1046 = vrot.slane %v1044, 4
        %v1047 = vrot.slane %v901, 5
        %v1048 = vsel %vm964, %v1046, %v1047
        %v1049 = vrot.slane %v902, 5
        %v1050 = vrot.slane %v1049, 4
        %v1051 = vrot.slane %v903, 5
        %v1052 = vsel %vm964, %v1050, %v1051
        %v1053 = vrot.slane %v1051, 4
        %v1054 = vrot.slane %v904, 5
        %v1055 = vsel %vm964, %v1053, %v1054
        %v1056 = vrot.slane %v905, 5
        %v1057 = vrot.slane %v1056, 4
        %v1058 = vrot.slane %v906, 5
        %v1059 = vsel %vm964, %v1057, %v1058
        %v1060 = vrot.slane %v1058, 4
        %v1061 = vrot.slane %v907, 5
        %v1062 = vsel %vm964, %v1060, %v1061
        %v1063 = vrot.slane %v908, 5
        %v1064 = vrot.slane %v1063, 4
        %v1065 = vrot.slane %v909, 5
        %v1066 = vsel %vm964, %v1064, %v1065
        %v1067 = vrot.slane %v1065, 4
        %v1068 = vrot.slane %v910, 5
        %v1069 = vsel %vm964, %v1067, %v1068
        %v1070 = vrot.slane %v911, 5
        %v1071 = vrot.slane %v1070, 4
        %v1072 = vrot.slane %v912, 5
        %v1073 = vsel %vm964, %v1071, %v1072
        %v1074 = vrot.slane %v1072, 4
        %v1075 = vrot.slane %v913, 5
        %v1076 = vsel %vm964, %v1074, %v1075
        %v1109 = vadd.bf16 %v810, %v968
        %v1110 = vadd.bf16 %v811, %v971
        %v1111 = vadd.bf16 %v812, %v975
        %v1112 = vadd.bf16 %v813, %v978
        %v1113 = vadd.bf16 %v814, %v982
        %v1114 = vadd.bf16 %v815, %v985
        %v1115 = vadd.bf16 %v816, %v989
        %v1116 = vadd.bf16 %v817, %v992
        %v1117 = vadd.bf16 %v818, %v996
        %v1118 = vadd.bf16 %v819, %v999
        %v1119 = vadd.bf16 %v820, %v1003
        %v1120 = vadd.bf16 %v821, %v1006
        %v1121 = vadd.bf16 %v822, %v1010
        %v1122 = vadd.bf16 %v823, %v1013
        %v1123 = vadd.bf16 %v824, %v1017
        %v1124 = vadd.bf16 %v825, %v1020
        %v1125 = vadd.bf16 %v826, %v1024
        %v1126 = vadd.bf16 %v827, %v1027
        %v1127 = vadd.bf16 %v828, %v1031
        %v1128 = vadd.bf16 %v829, %v1034
        %v1129 = vadd.bf16 %v830, %v1038
        %v1130 = vadd.bf16 %v831, %v1041
        %v1131 = vadd.bf16 %v832, %v1045
        %v1132 = vadd.bf16 %v833, %v1048
        %v1133 = vadd.bf16 %v834, %v1052
        %v1134 = vadd.bf16 %v835, %v1055
        %v1135 = vadd.bf16 %v836, %v1059
        %v1136 = vadd.bf16 %v837, %v1062
        %v1137 = vadd.bf16 %v838, %v1066
        %v1138 = vadd.bf16 %v839, %v1069
        %v1139 = vadd.bf16 %v840, %v1073
        %v1140 = vadd.bf16 %v841, %v1076
        %s1141 = scalar_lea.vmem %s236, 12
        %v1142 = vld [vmem:[%s1141] sm:$0xf]
        %v1143 = vld [vmem:[%s1141 + $0x4] sm:$0xf]
        %v1144 = vld [vmem:[%s1141 + $0xc] sm:$0xf]
        %v1145 = vld [vmem:[%s1141 + $0x10] sm:$0xf]
        %v1146 = vld [vmem:[%s1141 + $0x18] sm:$0xf]
        %v1147 = vld [vmem:[%s1141 + $0x1c] sm:$0xf]
        %v1148 = vld [vmem:[%s1141 + $0x24] sm:$0xf]
        %v1149 = vld [vmem:[%s1141 + $0x28] sm:$0xf]
        %v1150 = vld [vmem:[%s1141 + $0x30] sm:$0xf]
        %v1151 = vld [vmem:[%s1141 + $0x34] sm:$0xf]
        %v1152 = vld [vmem:[%s1141 + $0x3c] sm:$0xf]
        %v1153 = vld [vmem:[%s1141 + $0x40] sm:$0xf]
        %v1154 = vld [vmem:[%s1141 + $0x48] sm:$0xf]
        %v1155 = vld [vmem:[%s1141 + $0x4c] sm:$0xf]
        %v1156 = vld [vmem:[%s1141 + $0x54] sm:$0xf]
        %v1157 = vld [vmem:[%s1141 + $0x58] sm:$0xf]
        %v1158 = vld [vmem:[%s1141 + $0x60] sm:$0xf]
        %v1159 = vld [vmem:[%s1141 + $0x64] sm:$0xf]
        %v1160 = vld [vmem:[%s1141 + $0x6c] sm:$0xf]
        %v1161 = vld [vmem:[%s1141 + $0x70] sm:$0xf]
        %v1162 = vld [vmem:[%s1141 + $0x78] sm:$0xf]
        %v1163 = vld [vmem:[%s1141 + $0x7c] sm:$0xf]
        %v1164 = vld [vmem:[%s1141 + $0x84] sm:$0xf]
        %v1165 = vld [vmem:[%s1141 + $0x88] sm:$0xf]
        %v1166 = vld [vmem:[%s1141 + $0x90] sm:$0xf]
        %v1167 = vld [vmem:[%s1141 + $0x94] sm:$0xf]
        %v1168 = vld [vmem:[%s1141 + $0x9c] sm:$0xf]
        %v1169 = vld [vmem:[%s1141 + $0xa0] sm:$0xf]
        %v1170 = vld [vmem:[%s1141 + $0xa8] sm:$0xf]
        %v1171 = vld [vmem:[%s1141 + $0xac] sm:$0xf]
        %v1172 = vld [vmem:[%s1141 + $0xb4] sm:$0xf]
        %v1173 = vld [vmem:[%s1141 + $0xb8] sm:$0xf]
        %v1174 = vlaneseq
        %v1175 = vshrl.u32 %v1174, 7
        %v1176 = vsub.s32 1, %v1175
        %v1177 = vrot.slane %v333, %v1176
        %v1179 = vunpack.c.l.b16 %v1177
        %v1180 = vpack.c.b16 %v1179, %v1179
        %v1182 = vmul.bf16 %v1142, %v1180
        %v1183 = vmul.bf16 %v1143, %v1180
        %v1184 = vmul.bf16 %v1144, %v1180
        %v1185 = vmul.bf16 %v1145, %v1180
        %v1186 = vmul.bf16 %v1146, %v1180
        %v1187 = vmul.bf16 %v1147, %v1180
        %v1188 = vmul.bf16 %v1148, %v1180
        %v1189 = vmul.bf16 %v1149, %v1180
        %v1190 = vmul.bf16 %v1150, %v1180
        %v1191 = vmul.bf16 %v1151, %v1180
        %v1192 = vmul.bf16 %v1152, %v1180
        %v1193 = vmul.bf16 %v1153, %v1180
        %v1194 = vmul.bf16 %v1154, %v1180
        %v1195 = vmul.bf16 %v1155, %v1180
        %v1196 = vmul.bf16 %v1156, %v1180
        %v1197 = vmul.bf16 %v1157, %v1180
        %v1198 = vmul.bf16 %v1158, %v1180
        %v1199 = vmul.bf16 %v1159, %v1180
        %v1200 = vmul.bf16 %v1160, %v1180
        %v1201 = vmul.bf16 %v1161, %v1180
        %v1202 = vmul.bf16 %v1162, %v1180
        %v1203 = vmul.bf16 %v1163, %v1180
        %v1204 = vmul.bf16 %v1164, %v1180
        %v1205 = vmul.bf16 %v1165, %v1180
        %v1206 = vmul.bf16 %v1166, %v1180
        %v1207 = vmul.bf16 %v1167, %v1180
        %v1208 = vmul.bf16 %v1168, %v1180
        %v1209 = vmul.bf16 %v1169, %v1180
        %v1210 = vmul.bf16 %v1170, %v1180
        %v1211 = vmul.bf16 %v1171, %v1180
        %v1212 = vmul.bf16 %v1172, %v1180
        %v1213 = vmul.bf16 %v1173, %v1180
        %v1214 = vadd.bf16 %v1109, %v1182
        %v1215 = vadd.bf16 %v1110, %v1183
        %v1216 = vadd.bf16 %v1111, %v1184
        %v1217 = vadd.bf16 %v1112, %v1185
        %v1218 = vadd.bf16 %v1113, %v1186
        %v1219 = vadd.bf16 %v1114, %v1187
        %v1220 = vadd.bf16 %v1115, %v1188
        %v1221 = vadd.bf16 %v1116, %v1189
        %v1222 = vadd.bf16 %v1117, %v1190
        %v1223 = vadd.bf16 %v1118, %v1191
        %v1224 = vadd.bf16 %v1119, %v1192
        %v1225 = vadd.bf16 %v1120, %v1193
        %v1226 = vadd.bf16 %v1121, %v1194
        %v1227 = vadd.bf16 %v1122, %v1195
        %v1228 = vadd.bf16 %v1123, %v1196
        %v1229 = vadd.bf16 %v1124, %v1197
        %v1230 = vadd.bf16 %v1125, %v1198
        %v1231 = vadd.bf16 %v1126, %v1199
        %v1232 = vadd.bf16 %v1127, %v1200
        %v1233 = vadd.bf16 %v1128, %v1201
        %v1234 = vadd.bf16 %v1129, %v1202
        %v1235 = vadd.bf16 %v1130, %v1203
        %v1236 = vadd.bf16 %v1131, %v1204
        %v1237 = vadd.bf16 %v1132, %v1205
        %v1238 = vadd.bf16 %v1133, %v1206
        %v1239 = vadd.bf16 %v1134, %v1207
        %v1240 = vadd.bf16 %v1135, %v1208
        %v1241 = vadd.bf16 %v1136, %v1209
        %v1242 = vadd.bf16 %v1137, %v1210
        %v1243 = vadd.bf16 %v1138, %v1211
        %v1244 = vadd.bf16 %v1139, %v1212
        %v1245 = vadd.bf16 %v1140, %v1213
        %v1246 = vld [vmem:[%s1141 + $0x8] sm:$0x1]
        %v1247 = vld [vmem:[%s1141 + $0x14] sm:$0x1]
        %v1248 = vld [vmem:[%s1141 + $0x20] sm:$0x1]
        %v1249 = vld [vmem:[%s1141 + $0x2c] sm:$0x1]
        %v1250 = vld [vmem:[%s1141 + $0x38] sm:$0x1]
        %v1251 = vld [vmem:[%s1141 + $0x44] sm:$0x1]
        %v1252 = vld [vmem:[%s1141 + $0x50] sm:$0x1]
        %v1253 = vld [vmem:[%s1141 + $0x5c] sm:$0x1]
        %v1254 = vld [vmem:[%s1141 + $0x68] sm:$0x1]
        %v1255 = vld [vmem:[%s1141 + $0x74] sm:$0x1]
        %v1256 = vld [vmem:[%s1141 + $0x80] sm:$0x1]
        %v1257 = vld [vmem:[%s1141 + $0x8c] sm:$0x1]
        %v1258 = vld [vmem:[%s1141 + $0x98] sm:$0x1]
        %v1259 = vld [vmem:[%s1141 + $0xa4] sm:$0x1]
        %v1260 = vld [vmem:[%s1141 + $0xb0] sm:$0x1]
        %v1261 = vld [vmem:[%s1141 + $0xbc] sm:$0x1]
        %v1262 = vlaneseq
        %v1263 = vshrl.u32 %v1262, 7
        %v1264 = vsub.s32 2, %v1263
        %v1265 = vrot.slane %v274, %v1264
        %v1267 = vunpack.c.l.b16 %v1265
        %v1268 = vpack.c.b16 %v1267, %v1267
        %v1270 = vmul.bf16 %v1142, %v1268
        %v1271 = vmul.bf16 %v1143, %v1268
        %v1272 = vmul.bf16 %v1246, %v1268
        %v1273 = vmul.bf16 %v1144, %v1268
        %v1274 = vmul.bf16 %v1145, %v1268
        %v1275 = vmul.bf16 %v1247, %v1268
        %v1276 = vmul.bf16 %v1146, %v1268
        %v1277 = vmul.bf16 %v1147, %v1268
        %v1278 = vmul.bf16 %v1248, %v1268
        %v1279 = vmul.bf16 %v1148, %v1268
        %v1280 = vmul.bf16 %v1149, %v1268
        %v1281 = vmul.bf16 %v1249, %v1268
        %v1282 = vmul.bf16 %v1150, %v1268
        %v1283 = vmul.bf16 %v1151, %v1268
        %v1284 = vmul.bf16 %v1250, %v1268
        %v1285 = vmul.bf16 %v1152, %v1268
        %v1286 = vmul.bf16 %v1153, %v1268
        %v1287 = vmul.bf16 %v1251, %v1268
        %v1288 = vmul.bf16 %v1154, %v1268
        %v1289 = vmul.bf16 %v1155, %v1268
        %v1290 = vmul.bf16 %v1252, %v1268
        %v1291 = vmul.bf16 %v1156, %v1268
        %v1292 = vmul.bf16 %v1157, %v1268
        %v1293 = vmul.bf16 %v1253, %v1268
        %v1294 = vmul.bf16 %v1158, %v1268
        %v1295 = vmul.bf16 %v1159, %v1268
        %v1296 = vmul.bf16 %v1254, %v1268
        %v1297 = vmul.bf16 %v1160, %v1268
        %v1298 = vmul.bf16 %v1161, %v1268
        %v1299 = vmul.bf16 %v1255, %v1268
        %v1300 = vmul.bf16 %v1162, %v1268
        %v1301 = vmul.bf16 %v1163, %v1268
        %v1302 = vmul.bf16 %v1256, %v1268
        %v1303 = vmul.bf16 %v1164, %v1268
        %v1304 = vmul.bf16 %v1165, %v1268
        %v1305 = vmul.bf16 %v1257, %v1268
        %v1306 = vmul.bf16 %v1166, %v1268
        %v1307 = vmul.bf16 %v1167, %v1268
        %v1308 = vmul.bf16 %v1258, %v1268
        %v1309 = vmul.bf16 %v1168, %v1268
        %v1310 = vmul.bf16 %v1169, %v1268
        %v1311 = vmul.bf16 %v1259, %v1268
        %v1312 = vmul.bf16 %v1170, %v1268
        %v1313 = vmul.bf16 %v1171, %v1268
        %v1314 = vmul.bf16 %v1260, %v1268
        %v1315 = vmul.bf16 %v1172, %v1268
        %v1316 = vmul.bf16 %v1173, %v1268
        %v1317 = vmul.bf16 %v1261, %v1268
        %v1319 = vshrl.u32 %v1270, 16
        %v1321 = vrot.slane %v1319, 4
        %v1322 = vshll.u32 %v1270, 16
        %v1324 = vrot.slane %v1322, 5
        %v1325 = vor.u32 %v1321, %v1324
        %v1326 = vrot.slane %v1325, 4
        %v1328 = vshll.u32 %v1271, 16
        %v1330 = vrot.slane %v1328, 5
        %v1331 = vsel %vm393, %v1326, %v1330
        %v1332 = vshrl.u32 %v1271, 16
        %v1334 = vrot.slane %v1332, 4
        %v1335 = vor.u32 %v1334, %v1330
        %v1336 = vrot.slane %v1335, 4
        %v1338 = vshll.u32 %v1272, 16
        %v1340 = vrot.slane %v1338, 5
        %v1341 = vsel %vm393, %v1336, %v1340
        %v1343 = vshrl.u32 %v1273, 16
        %v1345 = vrot.slane %v1343, 4
        %v1346 = vshll.u32 %v1273, 16
        %v1348 = vrot.slane %v1346, 5
        %v1349 = vor.u32 %v1345, %v1348
        %v1350 = vrot.slane %v1349, 4
        %v1352 = vshll.u32 %v1274, 16
        %v1354 = vrot.slane %v1352, 5
        %v1355 = vsel %vm393, %v1350, %v1354
        %v1356 = vshrl.u32 %v1274, 16
        %v1358 = vrot.slane %v1356, 4
        %v1359 = vor.u32 %v1358, %v1354
        %v1360 = vrot.slane %v1359, 4
        %v1362 = vshll.u32 %v1275, 16
        %v1364 = vrot.slane %v1362, 5
        %v1365 = vsel %vm393, %v1360, %v1364
        %v1367 = vshrl.u32 %v1276, 16
        %v1369 = vrot.slane %v1367, 4
        %v1370 = vshll.u32 %v1276, 16
        %v1372 = vrot.slane %v1370, 5
        %v1373 = vor.u32 %v1369, %v1372
        %v1374 = vrot.slane %v1373, 4
        %v1376 = vshll.u32 %v1277, 16
        %v1378 = vrot.slane %v1376, 5
        %v1379 = vsel %vm393, %v1374, %v1378
        %v1380 = vshrl.u32 %v1277, 16
        %v1382 = vrot.slane %v1380, 4
        %v1383 = vor.u32 %v1382, %v1378
        %v1384 = vrot.slane %v1383, 4
        %v1386 = vshll.u32 %v1278, 16
        %v1388 = vrot.slane %v1386, 5
        %v1389 = vsel %vm393, %v1384, %v1388
        %v1391 = vshrl.u32 %v1279, 16
        %v1393 = vrot.slane %v1391, 4
        %v1394 = vshll.u32 %v1279, 16
        %v1396 = vrot.slane %v1394, 5
        %v1397 = vor.u32 %v1393, %v1396
        %v1398 = vrot.slane %v1397, 4
        %v1400 = vshll.u32 %v1280, 16
        %v1402 = vrot.slane %v1400, 5
        %v1403 = vsel %vm393, %v1398, %v1402
        %v1404 = vshrl.u32 %v1280, 16
        %v1406 = vrot.slane %v1404, 4
        %v1407 = vor.u32 %v1406, %v1402
        %v1408 = vrot.slane %v1407, 4
        %v1410 = vshll.u32 %v1281, 16
        %v1412 = vrot.slane %v1410, 5
        %v1413 = vsel %vm393, %v1408, %v1412
        %v1415 = vshrl.u32 %v1282, 16
        %v1417 = vrot.slane %v1415, 4
        %v1418 = vshll.u32 %v1282, 16
        %v1420 = vrot.slane %v1418, 5
        %v1421 = vor.u32 %v1417, %v1420
        %v1422 = vrot.slane %v1421, 4
        %v1424 = vshll.u32 %v1283, 16
        %v1426 = vrot.slane %v1424, 5
        %v1427 = vsel %vm393, %v1422, %v1426
        %v1428 = vshrl.u32 %v1283, 16
        %v1430 = vrot.slane %v1428, 4
        %v1431 = vor.u32 %v1430, %v1426
        %v1432 = vrot.slane %v1431, 4
        %v1434 = vshll.u32 %v1284, 16
        %v1436 = vrot.slane %v1434, 5
        %v1437 = vsel %vm393, %v1432, %v1436
        %v1439 = vshrl.u32 %v1285, 16
        %v1441 = vrot.slane %v1439, 4
        %v1442 = vshll.u32 %v1285, 16
        %v1444 = vrot.slane %v1442, 5
        %v1445 = vor.u32 %v1441, %v1444
        %v1446 = vrot.slane %v1445, 4
        %v1448 = vshll.u32 %v1286, 16
        %v1450 = vrot.slane %v1448, 5
        %v1451 = vsel %vm393, %v1446, %v1450
        %v1452 = vshrl.u32 %v1286, 16
        %v1454 = vrot.slane %v1452, 4
        %v1455 = vor.u32 %v1454, %v1450
        %v1456 = vrot.slane %v1455, 4
        %v1458 = vshll.u32 %v1287, 16
        %v1460 = vrot.slane %v1458, 5
        %v1461 = vsel %vm393, %v1456, %v1460
        %v1463 = vshrl.u32 %v1288, 16
        %v1465 = vrot.slane %v1463, 4
        %v1466 = vshll.u32 %v1288, 16
        %v1468 = vrot.slane %v1466, 5
        %v1469 = vor.u32 %v1465, %v1468
        %v1470 = vrot.slane %v1469, 4
        %v1472 = vshll.u32 %v1289, 16
        %v1474 = vrot.slane %v1472, 5
        %v1475 = vsel %vm393, %v1470, %v1474
        %v1476 = vshrl.u32 %v1289, 16
        %v1478 = vrot.slane %v1476, 4
        %v1479 = vor.u32 %v1478, %v1474
        %v1480 = vrot.slane %v1479, 4
        %v1482 = vshll.u32 %v1290, 16
        %v1484 = vrot.slane %v1482, 5
        %v1485 = vsel %vm393, %v1480, %v1484
        %v1487 = vshrl.u32 %v1291, 16
        %v1489 = vrot.slane %v1487, 4
        %v1490 = vshll.u32 %v1291, 16
        %v1492 = vrot.slane %v1490, 5
        %v1493 = vor.u32 %v1489, %v1492
        %v1494 = vrot.slane %v1493, 4
        %v1496 = vshll.u32 %v1292, 16
        %v1498 = vrot.slane %v1496, 5
        %v1499 = vsel %vm393, %v1494, %v1498
        %v1500 = vshrl.u32 %v1292, 16
        %v1502 = vrot.slane %v1500, 4
        %v1503 = vor.u32 %v1502, %v1498
        %v1504 = vrot.slane %v1503, 4
        %v1506 = vshll.u32 %v1293, 16
        %v1508 = vrot.slane %v1506, 5
        %v1509 = vsel %vm393, %v1504, %v1508
        %v1511 = vshrl.u32 %v1294, 16
        %v1513 = vrot.slane %v1511, 4
        %v1514 = vshll.u32 %v1294, 16
        %v1516 = vrot.slane %v1514, 5
        %v1517 = vor.u32 %v1513, %v1516
        %v1518 = vrot.slane %v1517, 4
        %v1520 = vshll.u32 %v1295, 16
        %v1522 = vrot.slane %v1520, 5
        %v1523 = vsel %vm393, %v1518, %v1522
        %v1524 = vshrl.u32 %v1295, 16
        %v1526 = vrot.slane %v1524, 4
        %v1527 = vor.u32 %v1526, %v1522
        %v1528 = vrot.slane %v1527, 4
        %v1530 = vshll.u32 %v1296, 16
        %v1532 = vrot.slane %v1530, 5
        %v1533 = vsel %vm393, %v1528, %v1532
        %v1535 = vshrl.u32 %v1297, 16
        %v1537 = vrot.slane %v1535, 4
        %v1538 = vshll.u32 %v1297, 16
        %v1540 = vrot.slane %v1538, 5
        %v1541 = vor.u32 %v1537, %v1540
        %v1542 = vrot.slane %v1541, 4
        %v1544 = vshll.u32 %v1298, 16
        %v1546 = vrot.slane %v1544, 5
        %v1547 = vsel %vm393, %v1542, %v1546
        %v1548 = vshrl.u32 %v1298, 16
        %v1550 = vrot.slane %v1548, 4
        %v1551 = vor.u32 %v1550, %v1546
        %v1552 = vrot.slane %v1551, 4
        %v1554 = vshll.u32 %v1299, 16
        %v1556 = vrot.slane %v1554, 5
        %v1557 = vsel %vm393, %v1552, %v1556
        %v1559 = vshrl.u32 %v1300, 16
        %v1561 = vrot.slane %v1559, 4
        %v1562 = vshll.u32 %v1300, 16
        %v1564 = vrot.slane %v1562, 5
        %v1565 = vor.u32 %v1561, %v1564
        %v1566 = vrot.slane %v1565, 4
        %v1568 = vshll.u32 %v1301, 16
        %v1570 = vrot.slane %v1568, 5
        %v1571 = vsel %vm393, %v1566, %v1570
        %v1572 = vshrl.u32 %v1301, 16
        %v1574 = vrot.slane %v1572, 4
        %v1575 = vor.u32 %v1574, %v1570
        %v1576 = vrot.slane %v1575, 4
        %v1578 = vshll.u32 %v1302, 16
        %v1580 = vrot.slane %v1578, 5
        %v1581 = vsel %vm393, %v1576, %v1580
        %v1583 = vshrl.u32 %v1303, 16
        %v1585 = vrot.slane %v1583, 4
        %v1586 = vshll.u32 %v1303, 16
        %v1588 = vrot.slane %v1586, 5
        %v1589 = vor.u32 %v1585, %v1588
        %v1590 = vrot.slane %v1589, 4
        %v1592 = vshll.u32 %v1304, 16
        %v1594 = vrot.slane %v1592, 5
        %v1595 = vsel %vm393, %v1590, %v1594
        %v1596 = vshrl.u32 %v1304, 16
        %v1598 = vrot.slane %v1596, 4
        %v1599 = vor.u32 %v1598, %v1594
        %v1600 = vrot.slane %v1599, 4
        %v1602 = vshll.u32 %v1305, 16
        %v1604 = vrot.slane %v1602, 5
        %v1605 = vsel %vm393, %v1600, %v1604
        %v1607 = vshrl.u32 %v1306, 16
        %v1609 = vrot.slane %v1607, 4
        %v1610 = vshll.u32 %v1306, 16
        %v1612 = vrot.slane %v1610, 5
        %v1613 = vor.u32 %v1609, %v1612
        %v1614 = vrot.slane %v1613, 4
        %v1616 = vshll.u32 %v1307, 16
        %v1618 = vrot.slane %v1616, 5
        %v1619 = vsel %vm393, %v1614, %v1618
        %v1620 = vshrl.u32 %v1307, 16
        %v1622 = vrot.slane %v1620, 4
        %v1623 = vor.u32 %v1622, %v1618
        %v1624 = vrot.slane %v1623, 4
        %v1626 = vshll.u32 %v1308, 16
        %v1628 = vrot.slane %v1626, 5
        %v1629 = vsel %vm393, %v1624, %v1628
        %v1631 = vshrl.u32 %v1309, 16
        %v1633 = vrot.slane %v1631, 4
        %v1634 = vshll.u32 %v1309, 16
        %v1636 = vrot.slane %v1634, 5
        %v1637 = vor.u32 %v1633, %v1636
        %v1638 = vrot.slane %v1637, 4
        %v1640 = vshll.u32 %v1310, 16
        %v1642 = vrot.slane %v1640, 5
        %v1643 = vsel %vm393, %v1638, %v1642
        %v1644 = vshrl.u32 %v1310, 16
        %v1646 = vrot.slane %v1644, 4
        %v1647 = vor.u32 %v1646, %v1642
        %v1648 = vrot.slane %v1647, 4
        %v1650 = vshll.u32 %v1311, 16
        %v1652 = vrot.slane %v1650, 5
        %v1653 = vsel %vm393, %v1648, %v1652
        %v1655 = vshrl.u32 %v1312, 16
        %v1657 = vrot.slane %v1655, 4
        %v1658 = vshll.u32 %v1312, 16
        %v1660 = vrot.slane %v1658, 5
        %v1661 = vor.u32 %v1657, %v1660
        %v1662 = vrot.slane %v1661, 4
        %v1664 = vshll.u32 %v1313, 16
        %v1666 = vrot.slane %v1664, 5
        %v1667 = vsel %vm393, %v1662, %v1666
        %v1668 = vshrl.u32 %v1313, 16
        %v1670 = vrot.slane %v1668, 4
        %v1671 = vor.u32 %v1670, %v1666
        %v1672 = vrot.slane %v1671, 4
        %v1674 = vshll.u32 %v1314, 16
        %v1676 = vrot.slane %v1674, 5
        %v1677 = vsel %vm393, %v1672, %v1676
        %v1679 = vshrl.u32 %v1315, 16
        %v1681 = vrot.slane %v1679, 4
        %v1682 = vshll.u32 %v1315, 16
        %v1684 = vrot.slane %v1682, 5
        %v1685 = vor.u32 %v1681, %v1684
        %v1686 = vrot.slane %v1685, 4
        %v1688 = vshll.u32 %v1316, 16
        %v1690 = vrot.slane %v1688, 5
        %v1691 = vsel %vm393, %v1686, %v1690
        %v1692 = vshrl.u32 %v1316, 16
        %v1694 = vrot.slane %v1692, 4
        %v1695 = vor.u32 %v1694, %v1690
        %v1696 = vrot.slane %v1695, 4
        %v1698 = vshll.u32 %v1317, 16
        %v1700 = vrot.slane %v1698, 5
        %v1701 = vsel %vm393, %v1696, %v1700
        %v1734 = vadd.bf16 %v1214, %v1331
        %v1735 = vadd.bf16 %v1215, %v1341
        %v1736 = vadd.bf16 %v1216, %v1355
        %v1737 = vadd.bf16 %v1217, %v1365
        %v1738 = vadd.bf16 %v1218, %v1379
        %v1739 = vadd.bf16 %v1219, %v1389
        %v1740 = vadd.bf16 %v1220, %v1403
        %v1741 = vadd.bf16 %v1221, %v1413
        %v1742 = vadd.bf16 %v1222, %v1427
        %v1743 = vadd.bf16 %v1223, %v1437
        %v1744 = vadd.bf16 %v1224, %v1451
        %v1745 = vadd.bf16 %v1225, %v1461
        %v1746 = vadd.bf16 %v1226, %v1475
        %v1747 = vadd.bf16 %v1227, %v1485
        %v1748 = vadd.bf16 %v1228, %v1499
        %v1749 = vadd.bf16 %v1229, %v1509
        %v1750 = vadd.bf16 %v1230, %v1523
        %v1751 = vadd.bf16 %v1231, %v1533
        %v1752 = vadd.bf16 %v1232, %v1547
        %v1753 = vadd.bf16 %v1233, %v1557
        %v1754 = vadd.bf16 %v1234, %v1571
        %v1755 = vadd.bf16 %v1235, %v1581
        %v1756 = vadd.bf16 %v1236, %v1595
        %v1757 = vadd.bf16 %v1237, %v1605
        %v1758 = vadd.bf16 %v1238, %v1619
        %v1759 = vadd.bf16 %v1239, %v1629
        %v1760 = vadd.bf16 %v1240, %v1643
        %v1761 = vadd.bf16 %v1241, %v1653
        %v1762 = vadd.bf16 %v1242, %v1667
        %v1763 = vadd.bf16 %v1243, %v1677
        %v1764 = vadd.bf16 %v1244, %v1691
        %v1765 = vadd.bf16 %v1245, %v1701
        %v1766 = vld [vmem:[%s1141] sm:$0xe]
        %v1767 = vld [vmem:[%s1141 + $0xc] sm:$0xe]
        %v1768 = vld [vmem:[%s1141 + $0x18] sm:$0xe]
        %v1769 = vld [vmem:[%s1141 + $0x24] sm:$0xe]
        %v1770 = vld [vmem:[%s1141 + $0x30] sm:$0xe]
        %v1771 = vld [vmem:[%s1141 + $0x3c] sm:$0xe]
        %v1772 = vld [vmem:[%s1141 + $0x48] sm:$0xe]
        %v1773 = vld [vmem:[%s1141 + $0x54] sm:$0xe]
        %v1774 = vld [vmem:[%s1141 + $0x60] sm:$0xe]
        %v1775 = vld [vmem:[%s1141 + $0x6c] sm:$0xe]
        %v1776 = vld [vmem:[%s1141 + $0x78] sm:$0xe]
        %v1777 = vld [vmem:[%s1141 + $0x84] sm:$0xe]
        %v1778 = vld [vmem:[%s1141 + $0x90] sm:$0xe]
        %v1779 = vld [vmem:[%s1141 + $0x9c] sm:$0xe]
        %v1780 = vld [vmem:[%s1141 + $0xa8] sm:$0xe]
        %v1781 = vld [vmem:[%s1141 + $0xb4] sm:$0xe]
        %v1782 = vlaneseq
        %v1783 = vshrl.u32 %v1782, 7
        %v1784 = vsub.s32 2, %v1783
        %v1785 = vrot.slane %v333, %v1784
        %v1787 = vunpack.c.l.b16 %v1785
        %v1788 = vpack.c.b16 %v1787, %v1787
        %v1790 = vmul.bf16 %v1766, %v1788
        %v1791 = vmul.bf16 %v1143, %v1788
        %v1792 = vmul.bf16 %v1246, %v1788
        %v1793 = vmul.bf16 %v1767, %v1788
        %v1794 = vmul.bf16 %v1145, %v1788
        %v1795 = vmul.bf16 %v1247, %v1788
        %v1796 = vmul.bf16 %v1768, %v1788
        %v1797 = vmul.bf16 %v1147, %v1788
        %v1798 = vmul.bf16 %v1248, %v1788
        %v1799 = vmul.bf16 %v1769, %v1788
        %v1800 = vmul.bf16 %v1149, %v1788
        %v1801 = vmul.bf16 %v1249, %v1788
        %v1802 = vmul.bf16 %v1770, %v1788
        %v1803 = vmul.bf16 %v1151, %v1788
        %v1804 = vmul.bf16 %v1250, %v1788
        %v1805 = vmul.bf16 %v1771, %v1788
        %v1806 = vmul.bf16 %v1153, %v1788
        %v1807 = vmul.bf16 %v1251, %v1788
        %v1808 = vmul.bf16 %v1772, %v1788
        %v1809 = vmul.bf16 %v1155, %v1788
        %v1810 = vmul.bf16 %v1252, %v1788
        %v1811 = vmul.bf16 %v1773, %v1788
        %v1812 = vmul.bf16 %v1157, %v1788
        %v1813 = vmul.bf16 %v1253, %v1788
        %v1814 = vmul.bf16 %v1774, %v1788
        %v1815 = vmul.bf16 %v1159, %v1788
        %v1816 = vmul.bf16 %v1254, %v1788
        %v1817 = vmul.bf16 %v1775, %v1788
        %v1818 = vmul.bf16 %v1161, %v1788
        %v1819 = vmul.bf16 %v1255, %v1788
        %v1820 = vmul.bf16 %v1776, %v1788
        %v1821 = vmul.bf16 %v1163, %v1788
        %v1822 = vmul.bf16 %v1256, %v1788
        %v1823 = vmul.bf16 %v1777, %v1788
        %v1824 = vmul.bf16 %v1165, %v1788
        %v1825 = vmul.bf16 %v1257, %v1788
        %v1826 = vmul.bf16 %v1778, %v1788
        %v1827 = vmul.bf16 %v1167, %v1788
        %v1828 = vmul.bf16 %v1258, %v1788
        %v1829 = vmul.bf16 %v1779, %v1788
        %v1830 = vmul.bf16 %v1169, %v1788
        %v1831 = vmul.bf16 %v1259, %v1788
        %v1832 = vmul.bf16 %v1780, %v1788
        %v1833 = vmul.bf16 %v1171, %v1788
        %v1834 = vmul.bf16 %v1260, %v1788
        %v1835 = vmul.bf16 %v1781, %v1788
        %v1836 = vmul.bf16 %v1173, %v1788
        %v1837 = vmul.bf16 %v1261, %v1788
        %v1886 = vrot.slane %v1790, 5
        %v1887 = vrot.slane %v1886, 4
        %v1888 = vrot.slane %v1791, 5
        %v1889 = vsel %vm964, %v1887, %v1888
        %v1890 = vrot.slane %v1888, 4
        %v1891 = vrot.slane %v1792, 5
        %v1892 = vsel %vm964, %v1890, %v1891
        %v1893 = vrot.slane %v1793, 5
        %v1894 = vrot.slane %v1893, 4
        %v1895 = vrot.slane %v1794, 5
        %v1896 = vsel %vm964, %v1894, %v1895
        %v1897 = vrot.slane %v1895, 4
        %v1898 = vrot.slane %v1795, 5
        %v1899 = vsel %vm964, %v1897, %v1898
        %v1900 = vrot.slane %v1796, 5
        %v1901 = vrot.slane %v1900, 4
        %v1902 = vrot.slane %v1797, 5
        %v1903 = vsel %vm964, %v1901, %v1902
        %v1904 = vrot.slane %v1902, 4
        %v1905 = vrot.slane %v1798, 5
        %v1906 = vsel %vm964, %v1904, %v1905
        %v1907 = vrot.slane %v1799, 5
        %v1908 = vrot.slane %v1907, 4
        %v1909 = vrot.slane %v1800, 5
        %v1910 = vsel %vm964, %v1908, %v1909
        %v1911 = vrot.slane %v1909, 4
        %v1912 = vrot.slane %v1801, 5
        %v1913 = vsel %vm964, %v1911, %v1912
        %v1914 = vrot.slane %v1802, 5
        %v1915 = vrot.slane %v1914, 4
        %v1916 = vrot.slane %v1803, 5
        %v1917 = vsel %vm964, %v1915, %v1916
        %v1918 = vrot.slane %v1916, 4
        %v1919 = vrot.slane %v1804, 5
        %v1920 = vsel %vm964, %v1918, %v1919
        %v1921 = vrot.slane %v1805, 5
        %v1922 = vrot.slane %v1921, 4
        %v1923 = vrot.slane %v1806, 5
        %v1924 = vsel %vm964, %v1922, %v1923
        %v1925 = vrot.slane %v1923, 4
        %v1926 = vrot.slane %v1807, 5
        %v1927 = vsel %vm964, %v1925, %v1926
        %v1928 = vrot.slane %v1808, 5
        %v1929 = vrot.slane %v1928, 4
        %v1930 = vrot.slane %v1809, 5
        %v1931 = vsel %vm964, %v1929, %v1930
        %v1932 = vrot.slane %v1930, 4
        %v1933 = vrot.slane %v1810, 5
        %v1934 = vsel %vm964, %v1932, %v1933
        %v1935 = vrot.slane %v1811, 5
        %v1936 = vrot.slane %v1935, 4
        %v1937 = vrot.slane %v1812, 5
        %v1938 = vsel %vm964, %v1936, %v1937
        %v1939 = vrot.slane %v1937, 4
        %v1940 = vrot.slane %v1813, 5
        %v1941 = vsel %vm964, %v1939, %v1940
        %v1942 = vrot.slane %v1814, 5
        %v1943 = vrot.slane %v1942, 4
        %v1944 = vrot.slane %v1815, 5
        %v1945 = vsel %vm964, %v1943, %v1944
        %v1946 = vrot.slane %v1944, 4
        %v1947 = vrot.slane %v1816, 5
        %v1948 = vsel %vm964, %v1946, %v1947
        %v1949 = vrot.slane %v1817, 5
        %v1950 = vrot.slane %v1949, 4
        %v1951 = vrot.slane %v1818, 5
        %v1952 = vsel %vm964, %v1950, %v1951
        %v1953 = vrot.slane %v1951, 4
        %v1954 = vrot.slane %v1819, 5
        %v1955 = vsel %vm964, %v1953, %v1954
        %v1956 = vrot.slane %v1820, 5
        %v1957 = vrot.slane %v1956, 4
        %v1958 = vrot.slane %v1821, 5
        %v1959 = vsel %vm964, %v1957, %v1958
        %v1960 = vrot.slane %v1958, 4
        %v1961 = vrot.slane %v1822, 5
        %v1962 = vsel %vm964, %v1960, %v1961
        %v1963 = vrot.slane %v1823, 5
        %v1964 = vrot.slane %v1963, 4
        %v1965 = vrot.slane %v1824, 5
        %v1966 = vsel %vm964, %v1964, %v1965
        %v1967 = vrot.slane %v1965, 4
        %v1968 = vrot.slane %v1825, 5
        %v1969 = vsel %vm964, %v1967, %v1968
        %v1970 = vrot.slane %v1826, 5
        %v1971 = vrot.slane %v1970, 4
        %v1972 = vrot.slane %v1827, 5
        %v1973 = vsel %vm964, %v1971, %v1972
        %v1974 = vrot.slane %v1972, 4
        %v1975 = vrot.slane %v1828, 5
        %v1976 = vsel %vm964, %v1974, %v1975
        %v1977 = vrot.slane %v1829, 5
        %v1978 = vrot.slane %v1977, 4
        %v1979 = vrot.slane %v1830, 5
        %v1980 = vsel %vm964, %v1978, %v1979
        %v1981 = vrot.slane %v1979, 4
        %v1982 = vrot.slane %v1831, 5
        %v1983 = vsel %vm964, %v1981, %v1982
        %v1984 = vrot.slane %v1832, 5
        %v1985 = vrot.slane %v1984, 4
        %v1986 = vrot.slane %v1833, 5
        %v1987 = vsel %vm964, %v1985, %v1986
        %v1988 = vrot.slane %v1986, 4
        %v1989 = vrot.slane %v1834, 5
        %v1990 = vsel %vm964, %v1988, %v1989
        %v1991 = vrot.slane %v1835, 5
        %v1992 = vrot.slane %v1991, 4
        %v1993 = vrot.slane %v1836, 5
        %v1994 = vsel %vm964, %v1992, %v1993
        %v1995 = vrot.slane %v1993, 4
        %v1996 = vrot.slane %v1837, 5
        %v1997 = vsel %vm964, %v1995, %v1996
        %v2030 = vadd.bf16 %v1734, %v1889
        %v2031 = vadd.bf16 %v1735, %v1892
        %v2032 = vadd.bf16 %v1736, %v1896
        %v2033 = vadd.bf16 %v1737, %v1899
        %v2034 = vadd.bf16 %v1738, %v1903
        %v2035 = vadd.bf16 %v1739, %v1906
        %v2036 = vadd.bf16 %v1740, %v1910
        %v2037 = vadd.bf16 %v1741, %v1913
        %v2038 = vadd.bf16 %v1742, %v1917
        %v2039 = vadd.bf16 %v1743, %v1920
        %v2040 = vadd.bf16 %v1744, %v1924
        %v2041 = vadd.bf16 %v1745, %v1927
        %v2042 = vadd.bf16 %v1746, %v1931
        %v2043 = vadd.bf16 %v1747, %v1934
        %v2044 = vadd.bf16 %v1748, %v1938
        %v2045 = vadd.bf16 %v1749, %v1941
        %v2046 = vadd.bf16 %v1750, %v1945
        %v2047 = vadd.bf16 %v1751, %v1948
        %v2048 = vadd.bf16 %v1752, %v1952
        %v2049 = vadd.bf16 %v1753, %v1955
        %v2050 = vadd.bf16 %v1754, %v1959
        %v2051 = vadd.bf16 %v1755, %v1962
        %v2052 = vadd.bf16 %v1756, %v1966
        %v2053 = vadd.bf16 %v1757, %v1969
        %v2054 = vadd.bf16 %v1758, %v1973
        %v2055 = vadd.bf16 %v1759, %v1976
        %v2056 = vadd.bf16 %v1760, %v1980
        %v2057 = vadd.bf16 %v1761, %v1983
        %v2058 = vadd.bf16 %v1762, %v1987
        %v2059 = vadd.bf16 %v1763, %v1990
        %v2060 = vadd.bf16 %v1764, %v1994
        %v2061 = vadd.bf16 %v1765, %v1997
        %s2062 = scalar_lea.vmem %s236, 24
        %v2063 = vld [vmem:[%s2062] sm:$0xf]
        %v2064 = vld [vmem:[%s2062 + $0x4] sm:$0xf]
        %v2065 = vld [vmem:[%s2062 + $0xc] sm:$0xf]
        %v2066 = vld [vmem:[%s2062 + $0x10] sm:$0xf]
        %v2067 = vld [vmem:[%s2062 + $0x18] sm:$0xf]
        %v2068 = vld [vmem:[%s2062 + $0x1c] sm:$0xf]
        %v2069 = vld [vmem:[%s2062 + $0x24] sm:$0xf]
        %v2070 = vld [vmem:[%s2062 + $0x28] sm:$0xf]
        %v2071 = vld [vmem:[%s2062 + $0x30] sm:$0xf]
        %v2072 = vld [vmem:[%s2062 + $0x34] sm:$0xf]
        %v2073 = vld [vmem:[%s2062 + $0x3c] sm:$0xf]
        %v2074 = vld [vmem:[%s2062 + $0x40] sm:$0xf]
        %v2075 = vld [vmem:[%s2062 + $0x48] sm:$0xf]
        %v2076 = vld [vmem:[%s2062 + $0x4c] sm:$0xf]
        %v2077 = vld [vmem:[%s2062 + $0x54] sm:$0xf]
        %v2078 = vld [vmem:[%s2062 + $0x58] sm:$0xf]
        %v2079 = vld [vmem:[%s2062 + $0x60] sm:$0xf]
        %v2080 = vld [vmem:[%s2062 + $0x64] sm:$0xf]
        %v2081 = vld [vmem:[%s2062 + $0x6c] sm:$0xf]
        %v2082 = vld [vmem:[%s2062 + $0x70] sm:$0xf]
        %v2083 = vld [vmem:[%s2062 + $0x78] sm:$0xf]
        %v2084 = vld [vmem:[%s2062 + $0x7c] sm:$0xf]
        %v2085 = vld [vmem:[%s2062 + $0x84] sm:$0xf]
        %v2086 = vld [vmem:[%s2062 + $0x88] sm:$0xf]
        %v2087 = vld [vmem:[%s2062 + $0x90] sm:$0xf]
        %v2088 = vld [vmem:[%s2062 + $0x94] sm:$0xf]
        %v2089 = vld [vmem:[%s2062 + $0x9c] sm:$0xf]
        %v2090 = vld [vmem:[%s2062 + $0xa0] sm:$0xf]
        %v2091 = vld [vmem:[%s2062 + $0xa8] sm:$0xf]
        %v2092 = vld [vmem:[%s2062 + $0xac] sm:$0xf]
        %v2093 = vld [vmem:[%s2062 + $0xb4] sm:$0xf]
        %v2094 = vld [vmem:[%s2062 + $0xb8] sm:$0xf]
        %v2095 = vlaneseq
        %v2096 = vshrl.u32 %v2095, 7
        %v2097 = vsub.s32 3, %v2096
        %v2098 = vrot.slane %v274, %v2097
        %v2100 = vunpack.c.l.b16 %v2098
        %v2101 = vpack.c.b16 %v2100, %v2100
        %v2103 = vmul.bf16 %v2063, %v2101
        %v2104 = vmul.bf16 %v2064, %v2101
        %v2105 = vmul.bf16 %v2065, %v2101
        %v2106 = vmul.bf16 %v2066, %v2101
        %v2107 = vmul.bf16 %v2067, %v2101
        %v2108 = vmul.bf16 %v2068, %v2101
        %v2109 = vmul.bf16 %v2069, %v2101
        %v2110 = vmul.bf16 %v2070, %v2101
        %v2111 = vmul.bf16 %v2071, %v2101
        %v2112 = vmul.bf16 %v2072, %v2101
        %v2113 = vmul.bf16 %v2073, %v2101
        %v2114 = vmul.bf16 %v2074, %v2101
        %v2115 = vmul.bf16 %v2075, %v2101
        %v2116 = vmul.bf16 %v2076, %v2101
        %v2117 = vmul.bf16 %v2077, %v2101
        %v2118 = vmul.bf16 %v2078, %v2101
        %v2119 = vmul.bf16 %v2079, %v2101
        %v2120 = vmul.bf16 %v2080, %v2101
        %v2121 = vmul.bf16 %v2081, %v2101
        %v2122 = vmul.bf16 %v2082, %v2101
        %v2123 = vmul.bf16 %v2083, %v2101
        %v2124 = vmul.bf16 %v2084, %v2101
        %v2125 = vmul.bf16 %v2085, %v2101
        %v2126 = vmul.bf16 %v2086, %v2101
        %v2127 = vmul.bf16 %v2087, %v2101
        %v2128 = vmul.bf16 %v2088, %v2101
        %v2129 = vmul.bf16 %v2089, %v2101
        %v2130 = vmul.bf16 %v2090, %v2101
        %v2131 = vmul.bf16 %v2091, %v2101
        %v2132 = vmul.bf16 %v2092, %v2101
        %v2133 = vmul.bf16 %v2093, %v2101
        %v2134 = vmul.bf16 %v2094, %v2101
        %v2135 = vadd.bf16 %v2030, %v2103
        %v2136 = vadd.bf16 %v2031, %v2104
        %v2137 = vadd.bf16 %v2032, %v2105
        %v2138 = vadd.bf16 %v2033, %v2106
        %v2139 = vadd.bf16 %v2034, %v2107
        %v2140 = vadd.bf16 %v2035, %v2108
        %v2141 = vadd.bf16 %v2036, %v2109
        %v2142 = vadd.bf16 %v2037, %v2110
        %v2143 = vadd.bf16 %v2038, %v2111
        %v2144 = vadd.bf16 %v2039, %v2112
        %v2145 = vadd.bf16 %v2040, %v2113
        %v2146 = vadd.bf16 %v2041, %v2114
        %v2147 = vadd.bf16 %v2042, %v2115
        %v2148 = vadd.bf16 %v2043, %v2116
        %v2149 = vadd.bf16 %v2044, %v2117
        %v2150 = vadd.bf16 %v2045, %v2118
        %v2151 = vadd.bf16 %v2046, %v2119
        %v2152 = vadd.bf16 %v2047, %v2120
        %v2153 = vadd.bf16 %v2048, %v2121
        %v2154 = vadd.bf16 %v2049, %v2122
        %v2155 = vadd.bf16 %v2050, %v2123
        %v2156 = vadd.bf16 %v2051, %v2124
        %v2157 = vadd.bf16 %v2052, %v2125
        %v2158 = vadd.bf16 %v2053, %v2126
        %v2159 = vadd.bf16 %v2054, %v2127
        %v2160 = vadd.bf16 %v2055, %v2128
        %v2161 = vadd.bf16 %v2056, %v2129
        %v2162 = vadd.bf16 %v2057, %v2130
        %v2163 = vadd.bf16 %v2058, %v2131
        %v2164 = vadd.bf16 %v2059, %v2132
        %v2165 = vadd.bf16 %v2060, %v2133
        %v2166 = vadd.bf16 %v2061, %v2134
        %v2167 = vld [vmem:[%s2062 + $0x8] sm:$0x1]
        %v2168 = vld [vmem:[%s2062 + $0x14] sm:$0x1]
        %v2169 = vld [vmem:[%s2062 + $0x20] sm:$0x1]
        %v2170 = vld [vmem:[%s2062 + $0x2c] sm:$0x1]
        %v2171 = vld [vmem:[%s2062 + $0x38] sm:$0x1]
        %v2172 = vld [vmem:[%s2062 + $0x44] sm:$0x1]
        %v2173 = vld [vmem:[%s2062 + $0x50] sm:$0x1]
        %v2174 = vld [vmem:[%s2062 + $0x5c] sm:$0x1]
        %v2175 = vld [vmem:[%s2062 + $0x68] sm:$0x1]
        %v2176 = vld [vmem:[%s2062 + $0x74] sm:$0x1]
        %v2177 = vld [vmem:[%s2062 + $0x80] sm:$0x1]
        %v2178 = vld [vmem:[%s2062 + $0x8c] sm:$0x1]
        %v2179 = vld [vmem:[%s2062 + $0x98] sm:$0x1]
        %v2180 = vld [vmem:[%s2062 + $0xa4] sm:$0x1]
        %v2181 = vld [vmem:[%s2062 + $0xb0] sm:$0x1]
        %v2182 = vld [vmem:[%s2062 + $0xbc] sm:$0x1]
        %v2183 = vlaneseq
        %v2184 = vshrl.u32 %v2183, 7
        %v2185 = vsub.s32 3, %v2184
        %v2186 = vrot.slane %v333, %v2185
        %v2188 = vunpack.c.l.b16 %v2186
        %v2189 = vpack.c.b16 %v2188, %v2188
        %v2191 = vmul.bf16 %v2063, %v2189
        %v2192 = vmul.bf16 %v2064, %v2189
        %v2193 = vmul.bf16 %v2167, %v2189
        %v2194 = vmul.bf16 %v2065, %v2189
        %v2195 = vmul.bf16 %v2066, %v2189
        %v2196 = vmul.bf16 %v2168, %v2189
        %v2197 = vmul.bf16 %v2067, %v2189
        %v2198 = vmul.bf16 %v2068, %v2189
        %v2199 = vmul.bf16 %v2169, %v2189
        %v2200 = vmul.bf16 %v2069, %v2189
        %v2201 = vmul.bf16 %v2070, %v2189
        %v2202 = vmul.bf16 %v2170, %v2189
        %v2203 = vmul.bf16 %v2071, %v2189
        %v2204 = vmul.bf16 %v2072, %v2189
        %v2205 = vmul.bf16 %v2171, %v2189
        %v2206 = vmul.bf16 %v2073, %v2189
        %v2207 = vmul.bf16 %v2074, %v2189
        %v2208 = vmul.bf16 %v2172, %v2189
        %v2209 = vmul.bf16 %v2075, %v2189
        %v2210 = vmul.bf16 %v2076, %v2189
        %v2211 = vmul.bf16 %v2173, %v2189
        %v2212 = vmul.bf16 %v2077, %v2189
        %v2213 = vmul.bf16 %v2078, %v2189
        %v2214 = vmul.bf16 %v2174, %v2189
        %v2215 = vmul.bf16 %v2079, %v2189
        %v2216 = vmul.bf16 %v2080, %v2189
        %v2217 = vmul.bf16 %v2175, %v2189
        %v2218 = vmul.bf16 %v2081, %v2189
        %v2219 = vmul.bf16 %v2082, %v2189
        %v2220 = vmul.bf16 %v2176, %v2189
        %v2221 = vmul.bf16 %v2083, %v2189
        %v2222 = vmul.bf16 %v2084, %v2189
        %v2223 = vmul.bf16 %v2177, %v2189
        %v2224 = vmul.bf16 %v2085, %v2189
        %v2225 = vmul.bf16 %v2086, %v2189
        %v2226 = vmul.bf16 %v2178, %v2189
        %v2227 = vmul.bf16 %v2087, %v2189
        %v2228 = vmul.bf16 %v2088, %v2189
        %v2229 = vmul.bf16 %v2179, %v2189
        %v2230 = vmul.bf16 %v2089, %v2189
        %v2231 = vmul.bf16 %v2090, %v2189
        %v2232 = vmul.bf16 %v2180, %v2189
        %v2233 = vmul.bf16 %v2091, %v2189
        %v2234 = vmul.bf16 %v2092, %v2189
        %v2235 = vmul.bf16 %v2181, %v2189
        %v2236 = vmul.bf16 %v2093, %v2189
        %v2237 = vmul.bf16 %v2094, %v2189
        %v2238 = vmul.bf16 %v2182, %v2189
        %v2240 = vshrl.u32 %v2191, 16
        %v2242 = vrot.slane %v2240, 4
        %v2243 = vshll.u32 %v2191, 16
        %v2245 = vrot.slane %v2243, 5
        %v2246 = vor.u32 %v2242, %v2245
        %v2247 = vrot.slane %v2246, 4
        %v2249 = vshll.u32 %v2192, 16
        %v2251 = vrot.slane %v2249, 5
        %v2252 = vsel %vm393, %v2247, %v2251
        %v2253 = vshrl.u32 %v2192, 16
        %v2255 = vrot.slane %v2253, 4
        %v2256 = vor.u32 %v2255, %v2251
        %v2257 = vrot.slane %v2256, 4
        %v2259 = vshll.u32 %v2193, 16
        %v2261 = vrot.slane %v2259, 5
        %v2262 = vsel %vm393, %v2257, %v2261
        %v2264 = vshrl.u32 %v2194, 16
        %v2266 = vrot.slane %v2264, 4
        %v2267 = vshll.u32 %v2194, 16
        %v2269 = vrot.slane %v2267, 5
        %v2270 = vor.u32 %v2266, %v2269
        %v2271 = vrot.slane %v2270, 4
        %v2273 = vshll.u32 %v2195, 16
        %v2275 = vrot.slane %v2273, 5
        %v2276 = vsel %vm393, %v2271, %v2275
        %v2277 = vshrl.u32 %v2195, 16
        %v2279 = vrot.slane %v2277, 4
        %v2280 = vor.u32 %v2279, %v2275
        %v2281 = vrot.slane %v2280, 4
        %v2283 = vshll.u32 %v2196, 16
        %v2285 = vrot.slane %v2283, 5
        %v2286 = vsel %vm393, %v2281, %v2285
        %v2288 = vshrl.u32 %v2197, 16
        %v2290 = vrot.slane %v2288, 4
        %v2291 = vshll.u32 %v2197, 16
        %v2293 = vrot.slane %v2291, 5
        %v2294 = vor.u32 %v2290, %v2293
        %v2295 = vrot.slane %v2294, 4
        %v2297 = vshll.u32 %v2198, 16
        %v2299 = vrot.slane %v2297, 5
        %v2300 = vsel %vm393, %v2295, %v2299
        %v2301 = vshrl.u32 %v2198, 16
        %v2303 = vrot.slane %v2301, 4
        %v2304 = vor.u32 %v2303, %v2299
        %v2305 = vrot.slane %v2304, 4
        %v2307 = vshll.u32 %v2199, 16
        %v2309 = vrot.slane %v2307, 5
        %v2310 = vsel %vm393, %v2305, %v2309
        %v2312 = vshrl.u32 %v2200, 16
        %v2314 = vrot.slane %v2312, 4
        %v2315 = vshll.u32 %v2200, 16
        %v2317 = vrot.slane %v2315, 5
        %v2318 = vor.u32 %v2314, %v2317
        %v2319 = vrot.slane %v2318, 4
        %v2321 = vshll.u32 %v2201, 16
        %v2323 = vrot.slane %v2321, 5
        %v2324 = vsel %vm393, %v2319, %v2323
        %v2325 = vshrl.u32 %v2201, 16
        %v2327 = vrot.slane %v2325, 4
        %v2328 = vor.u32 %v2327, %v2323
        %v2329 = vrot.slane %v2328, 4
        %v2331 = vshll.u32 %v2202, 16
        %v2333 = vrot.slane %v2331, 5
        %v2334 = vsel %vm393, %v2329, %v2333
        %v2336 = vshrl.u32 %v2203, 16
        %v2338 = vrot.slane %v2336, 4
        %v2339 = vshll.u32 %v2203, 16
        %v2341 = vrot.slane %v2339, 5
        %v2342 = vor.u32 %v2338, %v2341
        %v2343 = vrot.slane %v2342, 4
        %v2345 = vshll.u32 %v2204, 16
        %v2347 = vrot.slane %v2345, 5
        %v2348 = vsel %vm393, %v2343, %v2347
        %v2349 = vshrl.u32 %v2204, 16
        %v2351 = vrot.slane %v2349, 4
        %v2352 = vor.u32 %v2351, %v2347
        %v2353 = vrot.slane %v2352, 4
        %v2355 = vshll.u32 %v2205, 16
        %v2357 = vrot.slane %v2355, 5
        %v2358 = vsel %vm393, %v2353, %v2357
        %v2360 = vshrl.u32 %v2206, 16
        %v2362 = vrot.slane %v2360, 4
        %v2363 = vshll.u32 %v2206, 16
        %v2365 = vrot.slane %v2363, 5
        %v2366 = vor.u32 %v2362, %v2365
        %v2367 = vrot.slane %v2366, 4
        %v2369 = vshll.u32 %v2207, 16
        %v2371 = vrot.slane %v2369, 5
        %v2372 = vsel %vm393, %v2367, %v2371
        %v2373 = vshrl.u32 %v2207, 16
        %v2375 = vrot.slane %v2373, 4
        %v2376 = vor.u32 %v2375, %v2371
        %v2377 = vrot.slane %v2376, 4
        %v2379 = vshll.u32 %v2208, 16
        %v2381 = vrot.slane %v2379, 5
        %v2382 = vsel %vm393, %v2377, %v2381
        %v2384 = vshrl.u32 %v2209, 16
        %v2386 = vrot.slane %v2384, 4
        %v2387 = vshll.u32 %v2209, 16
        %v2389 = vrot.slane %v2387, 5
        %v2390 = vor.u32 %v2386, %v2389
        %v2391 = vrot.slane %v2390, 4
        %v2393 = vshll.u32 %v2210, 16
        %v2395 = vrot.slane %v2393, 5
        %v2396 = vsel %vm393, %v2391, %v2395
        %v2397 = vshrl.u32 %v2210, 16
        %v2399 = vrot.slane %v2397, 4
        %v2400 = vor.u32 %v2399, %v2395
        %v2401 = vrot.slane %v2400, 4
        %v2403 = vshll.u32 %v2211, 16
        %v2405 = vrot.slane %v2403, 5
        %v2406 = vsel %vm393, %v2401, %v2405
        %v2408 = vshrl.u32 %v2212, 16
        %v2410 = vrot.slane %v2408, 4
        %v2411 = vshll.u32 %v2212, 16
        %v2413 = vrot.slane %v2411, 5
        %v2414 = vor.u32 %v2410, %v2413
        %v2415 = vrot.slane %v2414, 4
        %v2417 = vshll.u32 %v2213, 16
        %v2419 = vrot.slane %v2417, 5
        %v2420 = vsel %vm393, %v2415, %v2419
        %v2421 = vshrl.u32 %v2213, 16
        %v2423 = vrot.slane %v2421, 4
        %v2424 = vor.u32 %v2423, %v2419
        %v2425 = vrot.slane %v2424, 4
        %v2427 = vshll.u32 %v2214, 16
        %v2429 = vrot.slane %v2427, 5
        %v2430 = vsel %vm393, %v2425, %v2429
        %v2432 = vshrl.u32 %v2215, 16
        %v2434 = vrot.slane %v2432, 4
        %v2435 = vshll.u32 %v2215, 16
        %v2437 = vrot.slane %v2435, 5
        %v2438 = vor.u32 %v2434, %v2437
        %v2439 = vrot.slane %v2438, 4
        %v2441 = vshll.u32 %v2216, 16
        %v2443 = vrot.slane %v2441, 5
        %v2444 = vsel %vm393, %v2439, %v2443
        %v2445 = vshrl.u32 %v2216, 16
        %v2447 = vrot.slane %v2445, 4
        %v2448 = vor.u32 %v2447, %v2443
        %v2449 = vrot.slane %v2448, 4
        %v2451 = vshll.u32 %v2217, 16
        %v2453 = vrot.slane %v2451, 5
        %v2454 = vsel %vm393, %v2449, %v2453
        %v2456 = vshrl.u32 %v2218, 16
        %v2458 = vrot.slane %v2456, 4
        %v2459 = vshll.u32 %v2218, 16
        %v2461 = vrot.slane %v2459, 5
        %v2462 = vor.u32 %v2458, %v2461
        %v2463 = vrot.slane %v2462, 4
        %v2465 = vshll.u32 %v2219, 16
        %v2467 = vrot.slane %v2465, 5
        %v2468 = vsel %vm393, %v2463, %v2467
        %v2469 = vshrl.u32 %v2219, 16
        %v2471 = vrot.slane %v2469, 4
        %v2472 = vor.u32 %v2471, %v2467
        %v2473 = vrot.slane %v2472, 4
        %v2475 = vshll.u32 %v2220, 16
        %v2477 = vrot.slane %v2475, 5
        %v2478 = vsel %vm393, %v2473, %v2477
        %v2480 = vshrl.u32 %v2221, 16
        %v2482 = vrot.slane %v2480, 4
        %v2483 = vshll.u32 %v2221, 16
        %v2485 = vrot.slane %v2483, 5
        %v2486 = vor.u32 %v2482, %v2485
        %v2487 = vrot.slane %v2486, 4
        %v2489 = vshll.u32 %v2222, 16
        %v2491 = vrot.slane %v2489, 5
        %v2492 = vsel %vm393, %v2487, %v2491
        %v2493 = vshrl.u32 %v2222, 16
        %v2495 = vrot.slane %v2493, 4
        %v2496 = vor.u32 %v2495, %v2491
        %v2497 = vrot.slane %v2496, 4
        %v2499 = vshll.u32 %v2223, 16
        %v2501 = vrot.slane %v2499, 5
        %v2502 = vsel %vm393, %v2497, %v2501
        %v2504 = vshrl.u32 %v2224, 16
        %v2506 = vrot.slane %v2504, 4
        %v2507 = vshll.u32 %v2224, 16
        %v2509 = vrot.slane %v2507, 5
        %v2510 = vor.u32 %v2506, %v2509
        %v2511 = vrot.slane %v2510, 4
        %v2513 = vshll.u32 %v2225, 16
        %v2515 = vrot.slane %v2513, 5
        %v2516 = vsel %vm393, %v2511, %v2515
        %v2517 = vshrl.u32 %v2225, 16
        %v2519 = vrot.slane %v2517, 4
        %v2520 = vor.u32 %v2519, %v2515
        %v2521 = vrot.slane %v2520, 4
        %v2523 = vshll.u32 %v2226, 16
        %v2525 = vrot.slane %v2523, 5
        %v2526 = vsel %vm393, %v2521, %v2525
        %v2528 = vshrl.u32 %v2227, 16
        %v2530 = vrot.slane %v2528, 4
        %v2531 = vshll.u32 %v2227, 16
        %v2533 = vrot.slane %v2531, 5
        %v2534 = vor.u32 %v2530, %v2533
        %v2535 = vrot.slane %v2534, 4
        %v2537 = vshll.u32 %v2228, 16
        %v2539 = vrot.slane %v2537, 5
        %v2540 = vsel %vm393, %v2535, %v2539
        %v2541 = vshrl.u32 %v2228, 16
        %v2543 = vrot.slane %v2541, 4
        %v2544 = vor.u32 %v2543, %v2539
        %v2545 = vrot.slane %v2544, 4
        %v2547 = vshll.u32 %v2229, 16
        %v2549 = vrot.slane %v2547, 5
        %v2550 = vsel %vm393, %v2545, %v2549
        %v2552 = vshrl.u32 %v2230, 16
        %v2554 = vrot.slane %v2552, 4
        %v2555 = vshll.u32 %v2230, 16
        %v2557 = vrot.slane %v2555, 5
        %v2558 = vor.u32 %v2554, %v2557
        %v2559 = vrot.slane %v2558, 4
        %v2561 = vshll.u32 %v2231, 16
        %v2563 = vrot.slane %v2561, 5
        %v2564 = vsel %vm393, %v2559, %v2563
        %v2565 = vshrl.u32 %v2231, 16
        %v2567 = vrot.slane %v2565, 4
        %v2568 = vor.u32 %v2567, %v2563
        %v2569 = vrot.slane %v2568, 4
        %v2571 = vshll.u32 %v2232, 16
        %v2573 = vrot.slane %v2571, 5
        %v2574 = vsel %vm393, %v2569, %v2573
        %v2576 = vshrl.u32 %v2233, 16
        %v2578 = vrot.slane %v2576, 4
        %v2579 = vshll.u32 %v2233, 16
        %v2581 = vrot.slane %v2579, 5
        %v2582 = vor.u32 %v2578, %v2581
        %v2583 = vrot.slane %v2582, 4
        %v2585 = vshll.u32 %v2234, 16
        %v2587 = vrot.slane %v2585, 5
        %v2588 = vsel %vm393, %v2583, %v2587
        %v2589 = vshrl.u32 %v2234, 16
        %v2591 = vrot.slane %v2589, 4
        %v2592 = vor.u32 %v2591, %v2587
        %v2593 = vrot.slane %v2592, 4
        %v2595 = vshll.u32 %v2235, 16
        %v2597 = vrot.slane %v2595, 5
        %v2598 = vsel %vm393, %v2593, %v2597
        %v2600 = vshrl.u32 %v2236, 16
        %v2602 = vrot.slane %v2600, 4
        %v2603 = vshll.u32 %v2236, 16
        %v2605 = vrot.slane %v2603, 5
        %v2606 = vor.u32 %v2602, %v2605
        %v2607 = vrot.slane %v2606, 4
        %v2609 = vshll.u32 %v2237, 16
        %v2611 = vrot.slane %v2609, 5
        %v2612 = vsel %vm393, %v2607, %v2611
        %v2613 = vshrl.u32 %v2237, 16
        %v2615 = vrot.slane %v2613, 4
        %v2616 = vor.u32 %v2615, %v2611
        %v2617 = vrot.slane %v2616, 4
        %v2619 = vshll.u32 %v2238, 16
        %v2621 = vrot.slane %v2619, 5
        %v2622 = vsel %vm393, %v2617, %v2621
        %v2655 = vadd.bf16 %v2135, %v2252
        %v2656 = vadd.bf16 %v2136, %v2262
        %v2657 = vadd.bf16 %v2137, %v2276
        %v2658 = vadd.bf16 %v2138, %v2286
        %v2659 = vadd.bf16 %v2139, %v2300
        %v2660 = vadd.bf16 %v2140, %v2310
        %v2661 = vadd.bf16 %v2141, %v2324
        %v2662 = vadd.bf16 %v2142, %v2334
        %v2663 = vadd.bf16 %v2143, %v2348
        %v2664 = vadd.bf16 %v2144, %v2358
        %v2665 = vadd.bf16 %v2145, %v2372
        %v2666 = vadd.bf16 %v2146, %v2382
        %v2667 = vadd.bf16 %v2147, %v2396
        %v2668 = vadd.bf16 %v2148, %v2406
        %v2669 = vadd.bf16 %v2149, %v2420
        %v2670 = vadd.bf16 %v2150, %v2430
        %v2671 = vadd.bf16 %v2151, %v2444
        %v2672 = vadd.bf16 %v2152, %v2454
        %v2673 = vadd.bf16 %v2153, %v2468
        %v2674 = vadd.bf16 %v2154, %v2478
        %v2675 = vadd.bf16 %v2155, %v2492
        %v2676 = vadd.bf16 %v2156, %v2502
        %v2677 = vadd.bf16 %v2157, %v2516
        %v2678 = vadd.bf16 %v2158, %v2526
        %v2679 = vadd.bf16 %v2159, %v2540
        %v2680 = vadd.bf16 %v2160, %v2550
        %v2681 = vadd.bf16 %v2161, %v2564
        %v2682 = vadd.bf16 %v2162, %v2574
        %v2683 = vadd.bf16 %v2163, %v2588
        %v2684 = vadd.bf16 %v2164, %v2598
        %v2685 = vadd.bf16 %v2165, %v2612
        %v2686 = vadd.bf16 %v2166, %v2622
        %v2687 = vld [vmem:[%s2062] sm:$0xe]
        %v2688 = vld [vmem:[%s2062 + $0xc] sm:$0xe]
        %v2689 = vld [vmem:[%s2062 + $0x18] sm:$0xe]
        %v2690 = vld [vmem:[%s2062 + $0x24] sm:$0xe]
        %v2691 = vld [vmem:[%s2062 + $0x30] sm:$0xe]
        %v2692 = vld [vmem:[%s2062 + $0x3c] sm:$0xe]
        %v2693 = vld [vmem:[%s2062 + $0x48] sm:$0xe]
        %v2694 = vld [vmem:[%s2062 + $0x54] sm:$0xe]
        %v2695 = vld [vmem:[%s2062 + $0x60] sm:$0xe]
        %v2696 = vld [vmem:[%s2062 + $0x6c] sm:$0xe]
        %v2697 = vld [vmem:[%s2062 + $0x78] sm:$0xe]
        %v2698 = vld [vmem:[%s2062 + $0x84] sm:$0xe]
        %v2699 = vld [vmem:[%s2062 + $0x90] sm:$0xe]
        %v2700 = vld [vmem:[%s2062 + $0x9c] sm:$0xe]
        %v2701 = vld [vmem:[%s2062 + $0xa8] sm:$0xe]
        %v2702 = vld [vmem:[%s2062 + $0xb4] sm:$0xe]
        %v2704 = vpack.i.b16 %v240, %v240
        %v2706 = vlaneseq
        %v2707 = vshrl.u32 %v2706, 7
        %v2708 = vsub.s32 0, %v2707
        %v2709 = vrot.slane %v2704, %v2708
        %v2711 = vunpack.c.l.b16 %v2709
        %v2712 = vpack.c.b16 %v2711, %v2711
        %v2714 = vmul.bf16 %v2687, %v2712
        %v2715 = vmul.bf16 %v2064, %v2712
        %v2716 = vmul.bf16 %v2167, %v2712
        %v2717 = vmul.bf16 %v2688, %v2712
        %v2718 = vmul.bf16 %v2066, %v2712
        %v2719 = vmul.bf16 %v2168, %v2712
        %v2720 = vmul.bf16 %v2689, %v2712
        %v2721 = vmul.bf16 %v2068, %v2712
        %v2722 = vmul.bf16 %v2169, %v2712
        %v2723 = vmul.bf16 %v2690, %v2712
        %v2724 = vmul.bf16 %v2070, %v2712
        %v2725 = vmul.bf16 %v2170, %v2712
        %v2726 = vmul.bf16 %v2691, %v2712
        %v2727 = vmul.bf16 %v2072, %v2712
        %v2728 = vmul.bf16 %v2171, %v2712
        %v2729 = vmul.bf16 %v2692, %v2712
        %v2730 = vmul.bf16 %v2074, %v2712
        %v2731 = vmul.bf16 %v2172, %v2712
        %v2732 = vmul.bf16 %v2693, %v2712
        %v2733 = vmul.bf16 %v2076, %v2712
        %v2734 = vmul.bf16 %v2173, %v2712
        %v2735 = vmul.bf16 %v2694, %v2712
        %v2736 = vmul.bf16 %v2078, %v2712
        %v2737 = vmul.bf16 %v2174, %v2712
        %v2738 = vmul.bf16 %v2695, %v2712
        %v2739 = vmul.bf16 %v2080, %v2712
        %v2740 = vmul.bf16 %v2175, %v2712
        %v2741 = vmul.bf16 %v2696, %v2712
        %v2742 = vmul.bf16 %v2082, %v2712
        %v2743 = vmul.bf16 %v2176, %v2712
        %v2744 = vmul.bf16 %v2697, %v2712
        %v2745 = vmul.bf16 %v2084, %v2712
        %v2746 = vmul.bf16 %v2177, %v2712
        %v2747 = vmul.bf16 %v2698, %v2712
        %v2748 = vmul.bf16 %v2086, %v2712
        %v2749 = vmul.bf16 %v2178, %v2712
        %v2750 = vmul.bf16 %v2699, %v2712
        %v2751 = vmul.bf16 %v2088, %v2712
        %v2752 = vmul.bf16 %v2179, %v2712
        %v2753 = vmul.bf16 %v2700, %v2712
        %v2754 = vmul.bf16 %v2090, %v2712
        %v2755 = vmul.bf16 %v2180, %v2712
        %v2756 = vmul.bf16 %v2701, %v2712
        %v2757 = vmul.bf16 %v2092, %v2712
        %v2758 = vmul.bf16 %v2181, %v2712
        %v2759 = vmul.bf16 %v2702, %v2712
        %v2760 = vmul.bf16 %v2094, %v2712
        %v2761 = vmul.bf16 %v2182, %v2712
        %v2810 = vrot.slane %v2714, 5
        %v2811 = vrot.slane %v2810, 4
        %v2812 = vrot.slane %v2715, 5
        %v2813 = vsel %vm964, %v2811, %v2812
        %v2814 = vrot.slane %v2812, 4
        %v2815 = vrot.slane %v2716, 5
        %v2816 = vsel %vm964, %v2814, %v2815
        %v2817 = vrot.slane %v2717, 5
        %v2818 = vrot.slane %v2817, 4
        %v2819 = vrot.slane %v2718, 5
        %v2820 = vsel %vm964, %v2818, %v2819
        %v2821 = vrot.slane %v2819, 4
        %v2822 = vrot.slane %v2719, 5
        %v2823 = vsel %vm964, %v2821, %v2822
        %v2824 = vrot.slane %v2720, 5
        %v2825 = vrot.slane %v2824, 4
        %v2826 = vrot.slane %v2721, 5
        %v2827 = vsel %vm964, %v2825, %v2826
        %v2828 = vrot.slane %v2826, 4
        %v2829 = vrot.slane %v2722, 5
        %v2830 = vsel %vm964, %v2828, %v2829
        %v2831 = vrot.slane %v2723, 5
        %v2832 = vrot.slane %v2831, 4
        %v2833 = vrot.slane %v2724, 5
        %v2834 = vsel %vm964, %v2832, %v2833
        %v2835 = vrot.slane %v2833, 4
        %v2836 = vrot.slane %v2725, 5
        %v2837 = vsel %vm964, %v2835, %v2836
        %v2838 = vrot.slane %v2726, 5
        %v2839 = vrot.slane %v2838, 4
        %v2840 = vrot.slane %v2727, 5
        %v2841 = vsel %vm964, %v2839, %v2840
        %v2842 = vrot.slane %v2840, 4
        %v2843 = vrot.slane %v2728, 5
        %v2844 = vsel %vm964, %v2842, %v2843
        %v2845 = vrot.slane %v2729, 5
        %v2846 = vrot.slane %v2845, 4
        %v2847 = vrot.slane %v2730, 5
        %v2848 = vsel %vm964, %v2846, %v2847
        %v2849 = vrot.slane %v2847, 4
        %v2850 = vrot.slane %v2731, 5
        %v2851 = vsel %vm964, %v2849, %v2850
        %v2852 = vrot.slane %v2732, 5
        %v2853 = vrot.slane %v2852, 4
        %v2854 = vrot.slane %v2733, 5
        %v2855 = vsel %vm964, %v2853, %v2854
        %v2856 = vrot.slane %v2854, 4
        %v2857 = vrot.slane %v2734, 5
        %v2858 = vsel %vm964, %v2856, %v2857
        %v2859 = vrot.slane %v2735, 5
        %v2860 = vrot.slane %v2859, 4
        %v2861 = vrot.slane %v2736, 5
        %v2862 = vsel %vm964, %v2860, %v2861
        %v2863 = vrot.slane %v2861, 4
        %v2864 = vrot.slane %v2737, 5
        %v2865 = vsel %vm964, %v2863, %v2864
        %v2866 = vrot.slane %v2738, 5
        %v2867 = vrot.slane %v2866, 4
        %v2868 = vrot.slane %v2739, 5
        %v2869 = vsel %vm964, %v2867, %v2868
        %v2870 = vrot.slane %v2868, 4
        %v2871 = vrot.slane %v2740, 5
        %v2872 = vsel %vm964, %v2870, %v2871
        %v2873 = vrot.slane %v2741, 5
        %v2874 = vrot.slane %v2873, 4
        %v2875 = vrot.slane %v2742, 5
        %v2876 = vsel %vm964, %v2874, %v2875
        %v2877 = vrot.slane %v2875, 4
        %v2878 = vrot.slane %v2743, 5
        %v2879 = vsel %vm964, %v2877, %v2878
        %v2880 = vrot.slane %v2744, 5
        %v2881 = vrot.slane %v2880, 4
        %v2882 = vrot.slane %v2745, 5
        %v2883 = vsel %vm964, %v2881, %v2882
        %v2884 = vrot.slane %v2882, 4
        %v2885 = vrot.slane %v2746, 5
        %v2886 = vsel %vm964, %v2884, %v2885
        %v2887 = vrot.slane %v2747, 5
        %v2888 = vrot.slane %v2887, 4
        %v2889 = vrot.slane %v2748, 5
        %v2890 = vsel %vm964, %v2888, %v2889
        %v2891 = vrot.slane %v2889, 4
        %v2892 = vrot.slane %v2749, 5
        %v2893 = vsel %vm964, %v2891, %v2892
        %v2894 = vrot.slane %v2750, 5
        %v2895 = vrot.slane %v2894, 4
        %v2896 = vrot.slane %v2751, 5
        %v2897 = vsel %vm964, %v2895, %v2896
        %v2898 = vrot.slane %v2896, 4
        %v2899 = vrot.slane %v2752, 5
        %v2900 = vsel %vm964, %v2898, %v2899
        %v2901 = vrot.slane %v2753, 5
        %v2902 = vrot.slane %v2901, 4
        %v2903 = vrot.slane %v2754, 5
        %v2904 = vsel %vm964, %v2902, %v2903
        %v2905 = vrot.slane %v2903, 4
        %v2906 = vrot.slane %v2755, 5
        %v2907 = vsel %vm964, %v2905, %v2906
        %v2908 = vrot.slane %v2756, 5
        %v2909 = vrot.slane %v2908, 4
        %v2910 = vrot.slane %v2757, 5
        %v2911 = vsel %vm964, %v2909, %v2910
        %v2912 = vrot.slane %v2910, 4
        %v2913 = vrot.slane %v2758, 5
        %v2914 = vsel %vm964, %v2912, %v2913
        %v2915 = vrot.slane %v2759, 5
        %v2916 = vrot.slane %v2915, 4
        %v2917 = vrot.slane %v2760, 5
        %v2918 = vsel %vm964, %v2916, %v2917
        %v2919 = vrot.slane %v2917, 4
        %v2920 = vrot.slane %v2761, 5
        %v2921 = vsel %vm964, %v2919, %v2920
        %v2954 = vadd.bf16 %v2655, %v2813
        %v2955 = vadd.bf16 %v2656, %v2816
        %v2956 = vadd.bf16 %v2657, %v2820
        %v2957 = vadd.bf16 %v2658, %v2823
        %v2958 = vadd.bf16 %v2659, %v2827
        %v2959 = vadd.bf16 %v2660, %v2830
        %v2960 = vadd.bf16 %v2661, %v2834
        %v2961 = vadd.bf16 %v2662, %v2837
        %v2962 = vadd.bf16 %v2663, %v2841
        %v2963 = vadd.bf16 %v2664, %v2844
        %v2964 = vadd.bf16 %v2665, %v2848
        %v2965 = vadd.bf16 %v2666, %v2851
        %v2966 = vadd.bf16 %v2667, %v2855
        %v2967 = vadd.bf16 %v2668, %v2858
        %v2968 = vadd.bf16 %v2669, %v2862
        %v2969 = vadd.bf16 %v2670, %v2865
        %v2970 = vadd.bf16 %v2671, %v2869
        %v2971 = vadd.bf16 %v2672, %v2872
        %v2972 = vadd.bf16 %v2673, %v2876
        %v2973 = vadd.bf16 %v2674, %v2879
        %v2974 = vadd.bf16 %v2675, %v2883
        %v2975 = vadd.bf16 %v2676, %v2886
        %v2976 = vadd.bf16 %v2677, %v2890
        %v2977 = vadd.bf16 %v2678, %v2893
        %v2978 = vadd.bf16 %v2679, %v2897
        %v2979 = vadd.bf16 %v2680, %v2900
        %v2980 = vadd.bf16 %v2681, %v2904
        %v2981 = vadd.bf16 %v2682, %v2907
        %v2982 = vadd.bf16 %v2683, %v2911
        %v2983 = vadd.bf16 %v2684, %v2914
        %v2984 = vadd.bf16 %v2685, %v2918
        %v2985 = vadd.bf16 %v2686, %v2921
        %v2986 = vld [vmem:[%s2] sm:$0x1]
        %v2988 = vpack.i.b16 %v2986, %v2986
        %v2990 = vlaneseq
        %v2991 = vshrl.u32 %v2990, 7
        %v2992 = vsub.s32 0, %v2991
        %v2993 = vrot.slane %v2988, %v2992
        %v2995 = vunpack.c.l.b16 %v2993
        %v2996 = vpack.c.b16 %v2995, %v2995
        %v2998 = vadd.bf16 %v2954, %v2996
        %v2999 = vadd.bf16 %v2955, %v2996
        %v3000 = vadd.bf16 %v2956, %v2996
        %v3001 = vadd.bf16 %v2957, %v2996
        %v3002 = vadd.bf16 %v2958, %v2996
        %v3003 = vadd.bf16 %v2959, %v2996
        %v3004 = vadd.bf16 %v2960, %v2996
        %v3005 = vadd.bf16 %v2961, %v2996
        %v3006 = vadd.bf16 %v2962, %v2996
        %v3007 = vadd.bf16 %v2963, %v2996
        %v3008 = vadd.bf16 %v2964, %v2996
        %v3009 = vadd.bf16 %v2965, %v2996
        %v3010 = vadd.bf16 %v2966, %v2996
        %v3011 = vadd.bf16 %v2967, %v2996
        %v3012 = vadd.bf16 %v2968, %v2996
        %v3013 = vadd.bf16 %v2969, %v2996
        %v3014 = vadd.bf16 %v2970, %v2996
        %v3015 = vadd.bf16 %v2971, %v2996
        %v3016 = vadd.bf16 %v2972, %v2996
        %v3017 = vadd.bf16 %v2973, %v2996
        %v3018 = vadd.bf16 %v2974, %v2996
        %v3019 = vadd.bf16 %v2975, %v2996
        %v3020 = vadd.bf16 %v2976, %v2996
        %v3021 = vadd.bf16 %v2977, %v2996
        %v3022 = vadd.bf16 %v2978, %v2996
        %v3023 = vadd.bf16 %v2979, %v2996
        %v3024 = vadd.bf16 %v2980, %v2996
        %v3025 = vadd.bf16 %v2981, %v2996
        %v3026 = vadd.bf16 %v2982, %v2996
        %v3027 = vadd.bf16 %v2983, %v2996
        %v3028 = vadd.bf16 %v2984, %v2996
        %v3029 = vadd.bf16 %v2985, %v2996
        %v3030 = vmax.bf16 %v2998, 0
        %v3031 = vmax.bf16 %v2999, 0
        %v3032 = vmax.bf16 %v3000, 0
        %v3033 = vmax.bf16 %v3001, 0
        %v3034 = vmax.bf16 %v3002, 0
        %v3035 = vmax.bf16 %v3003, 0
        %v3036 = vmax.bf16 %v3004, 0
        %v3037 = vmax.bf16 %v3005, 0
        %v3038 = vmax.bf16 %v3006, 0
        %v3039 = vmax.bf16 %v3007, 0
        %v3040 = vmax.bf16 %v3008, 0
        %v3041 = vmax.bf16 %v3009, 0
        %v3042 = vmax.bf16 %v3010, 0
        %v3043 = vmax.bf16 %v3011, 0
        %v3044 = vmax.bf16 %v3012, 0
        %v3045 = vmax.bf16 %v3013, 0
        %v3046 = vmax.bf16 %v3014, 0
        %v3047 = vmax.bf16 %v3015, 0
        %v3048 = vmax.bf16 %v3016, 0
        %v3049 = vmax.bf16 %v3017, 0
        %v3050 = vmax.bf16 %v3018, 0
        %v3051 = vmax.bf16 %v3019, 0
        %v3052 = vmax.bf16 %v3020, 0
        %v3053 = vmax.bf16 %v3021, 0
        %v3054 = vmax.bf16 %v3022, 0
        %v3055 = vmax.bf16 %v3023, 0
        %v3056 = vmax.bf16 %v3024, 0
        %v3057 = vmax.bf16 %v3025, 0
        %v3058 = vmax.bf16 %v3026, 0
        %v3059 = vmax.bf16 %v3027, 0
        %v3060 = vmax.bf16 %v3028, 0
        %v3061 = vmax.bf16 %v3029, 0
        %v3062 = vld [vmem:[%s3] sm:$0xf]
        %v3063 = vld [vmem:[%s3 + $0x4] sm:$0xf]
        %v3064 = vld [vmem:[%s3 + $0x8] sm:$0xf]
        %v3065 = vld [vmem:[%s3 + $0xc] sm:$0xf]
        %v3066 = vld [vmem:[%s3 + $0x10] sm:$0xf]
        %v3067 = vld [vmem:[%s3 + $0x14] sm:$0xf]
        %v3068 = vld [vmem:[%s3 + $0x18] sm:$0xf]
        %v3069 = vld [vmem:[%s3 + $0x1c] sm:$0xf]
        %v3070 = vld [vmem:[%s3 + $0x20] sm:$0xf]
        %v3071 = vld [vmem:[%s3 + $0x24] sm:$0xf]
        %v3072 = vld [vmem:[%s3 + $0x28] sm:$0xf]
        %v3073 = vld [vmem:[%s3 + $0x2c] sm:$0xf]
        %v3074 = vld [vmem:[%s3 + $0x30] sm:$0xf]
        %v3075 = vld [vmem:[%s3 + $0x34] sm:$0xf]
        %v3076 = vld [vmem:[%s3 + $0x38] sm:$0xf]
        %v3077 = vld [vmem:[%s3 + $0x3c] sm:$0xf]
        %v3078 = vld [vmem:[%s4] sm:$0x1]
        %v3080 = vlaneseq
        %v3081 = vshrl.u32 %v3080, 7
        %v3082 = vsub.s32 0, %v3081
        %v3083 = vrot.slane %v3078, %v3082
        %v3117 = vunpack.c.l.b16 %v3030
        %v3118 = vunpack.c.l.b16 %v3031
        %v3119 = vunpack.c.l.b16 %v3032
        %v3120 = vunpack.c.l.b16 %v3033
        %v3121 = vunpack.c.l.b16 %v3034
        %v3122 = vunpack.c.l.b16 %v3035
        %v3123 = vunpack.c.l.b16 %v3036
        %v3124 = vunpack.c.l.b16 %v3037
        %v3125 = vunpack.c.l.b16 %v3038
        %v3126 = vunpack.c.l.b16 %v3039
        %v3127 = vunpack.c.l.b16 %v3040
        %v3128 = vunpack.c.l.b16 %v3041
        %v3129 = vunpack.c.l.b16 %v3042
        %v3130 = vunpack.c.l.b16 %v3043
        %v3131 = vunpack.c.l.b16 %v3044
        %v3132 = vunpack.c.l.b16 %v3045
        %v3133 = vunpack.c.l.b16 %v3046
        %v3134 = vunpack.c.l.b16 %v3047
        %v3135 = vunpack.c.l.b16 %v3048
        %v3136 = vunpack.c.l.b16 %v3049
        %v3137 = vunpack.c.l.b16 %v3050
        %v3138 = vunpack.c.l.b16 %v3051
        %v3139 = vunpack.c.l.b16 %v3052
        %v3140 = vunpack.c.l.b16 %v3053
        %v3141 = vunpack.c.l.b16 %v3054
        %v3142 = vunpack.c.l.b16 %v3055
        %v3143 = vunpack.c.l.b16 %v3056
        %v3144 = vunpack.c.l.b16 %v3057
        %v3145 = vunpack.c.l.b16 %v3058
        %v3146 = vunpack.c.l.b16 %v3059
        %v3147 = vunpack.c.l.b16 %v3060
        %v3148 = vunpack.c.l.b16 %v3061
        %v3149 = vpack.c.b16 %v3118, %v3117
        %v3150 = vpack.c.b16 %v3120, %v3119
        %v3151 = vpack.c.b16 %v3122, %v3121
        %v3152 = vpack.c.b16 %v3124, %v3123
        %v3153 = vpack.c.b16 %v3126, %v3125
        %v3154 = vpack.c.b16 %v3128, %v3127
        %v3155 = vpack.c.b16 %v3130, %v3129
        %v3156 = vpack.c.b16 %v3132, %v3131
        %v3157 = vpack.c.b16 %v3134, %v3133
        %v3158 = vpack.c.b16 %v3136, %v3135
        %v3159 = vpack.c.b16 %v3138, %v3137
        %v3160 = vpack.c.b16 %v3140, %v3139
        %v3161 = vpack.c.b16 %v3142, %v3141
        %v3162 = vpack.c.b16 %v3144, %v3143
        %v3163 = vpack.c.b16 %v3146, %v3145
        %v3164 = vpack.c.b16 %v3148, %v3147
        %v3197 = vunpack.c.l.b16 %v3062
        %v3198 = vunpack.c.l.b16 %v3063
        %v3199 = vunpack.c.l.b16 %v3064
        %v3200 = vunpack.c.l.b16 %v3065
        %v3201 = vunpack.c.l.b16 %v3066
        %v3202 = vunpack.c.l.b16 %v3067
        %v3203 = vunpack.c.l.b16 %v3068
        %v3204 = vunpack.c.l.b16 %v3069
        %v3205 = vunpack.c.l.b16 %v3070
        %v3206 = vunpack.c.l.b16 %v3071
        %v3207 = vunpack.c.l.b16 %v3072
        %v3208 = vunpack.c.l.b16 %v3073
        %v3209 = vunpack.c.l.b16 %v3074
        %v3210 = vunpack.c.l.b16 %v3075
        %v3211 = vunpack.c.l.b16 %v3076
        %v3212 = vunpack.c.l.b16 %v3077
        %v3213 = vpack.c.b16 %v3198, %v3197
        %v3214 = vpack.c.b16 %v3200, %v3199
        %v3215 = vpack.c.b16 %v3202, %v3201
        %v3216 = vpack.c.b16 %v3204, %v3203
        %v3217 = vpack.c.b16 %v3206, %v3205
        %v3218 = vpack.c.b16 %v3208, %v3207
        %v3219 = vpack.c.b16 %v3210, %v3209
        %v3220 = vpack.c.b16 %v3212, %v3211
        %3229 = vmatprep.subr.bf16.mxu0 0
        %3230 = vmatpush1.bf16.msra.mxu0 %v3213
        %3231 = vmatprep.subr.bf16.mxu0 0
        %3232 = vmatpush1.bf16.msra.mxu0 %v3214
        %3233 = vmatprep.subr.bf16.mxu0 0
        %3234 = vmatpush1.bf16.msra.mxu0 %v3215
        %3235 = vmatprep.subr.bf16.mxu0 0
        %3236 = vmatpush1.bf16.msra.mxu0 %v3216
        %3237 = vmatprep.subr.bf16.mxu0 0
        %3238 = vmatpush1.bf16.msra.mxu0 %v3217
        %3239 = vmatprep.subr.bf16.mxu0 0
        %3240 = vmatpush1.bf16.msra.mxu0 %v3218
        %3241 = vmatprep.subr.bf16.mxu0 0
        %3242 = vmatpush1.bf16.msra.mxu0 %v3219
        %3243 = vmatprep.subr.bf16.mxu0 0
        %3244 = vmatpush1.bf16.msra.mxu0 %v3220
        %3245 = vmatprep.subr.bf16.mxu0 0
        %3246 = vmatpush1.bf16.msra.mxu0 0
        %3247 = vmatprep.subr.bf16.mxu0 0
        %3248 = vmatpush1.bf16.msra.mxu0 0
        %3249 = vmatprep.subr.bf16.mxu0 0
        %3250 = vmatpush1.bf16.msra.mxu0 0
        %3251 = vmatprep.subr.bf16.mxu0 0
        %3252 = vmatpush1.bf16.msra.mxu0 0
        %3253 = vmatprep.subr.bf16.mxu0 0
        %3254 = vmatpush1.bf16.msra.mxu0 0
        %3255 = vmatprep.subr.bf16.mxu0 0
        %3256 = vmatpush1.bf16.msra.mxu0 0
        %3257 = vmatprep.subr.bf16.mxu0 0
        %3258 = vmatpush1.bf16.msra.mxu0 0
        %3259 = vmatprep.subr.bf16.mxu0 0
        %3260 = vmatpush1.bf16.msra.mxu0 0
        %3261 = vmatprep.mubr.bf16.mxu0 0
        %3262 = vmatmul.mubr.bf16.gmra.mrb[0].mxu0 %v3149
        %v3263 = vpop.f32.mrb[0].mxu0
        %v3264 = vadd.f32 %v3083, %v3263
        %v3265 = vpop.f32.mrb[0].mxu0
        %v3266 = vpop.f32.mrb[0].mxu0
        %v3267 = vadd.f32 %v3083, %v3266
        %v3268 = vpop.f32.mrb[0].mxu0
        %3269 = vmatprep.mubr.bf16.mxu0 0
        %3270 = vmatmul.mubr.bf16.gmra.mrb[0].mxu0 %v3150
        %v3271 = vpop.f32.mrb[0].mxu0
        %v3272 = vadd.f32 %v3083, %v3271
        %v3273 = vpop.f32.mrb[0].mxu0
        %v3274 = vpop.f32.mrb[0].mxu0
        %v3275 = vadd.f32 %v3083, %v3274
        %v3276 = vpop.f32.mrb[0].mxu0
        %3277 = vmatprep.mubr.bf16.mxu0 0
        %3278 = vmatmul.mubr.bf16.gmra.mrb[0].mxu0 %v3151
        %v3279 = vpop.f32.mrb[0].mxu0
        %v3280 = vadd.f32 %v3083, %v3279
        %v3281 = vpop.f32.mrb[0].mxu0
        %v3282 = vpop.f32.mrb[0].mxu0
        %v3283 = vadd.f32 %v3083, %v3282
        %v3284 = vpop.f32.mrb[0].mxu0
        %3285 = vmatprep.mubr.bf16.mxu0 0
        %3286 = vmatmul.mubr.bf16.gmra.mrb[0].mxu0 %v3152
        %v3287 = vpop.f32.mrb[0].mxu0
        %v3288 = vadd.f32 %v3083, %v3287
        %v3289 = vpop.f32.mrb[0].mxu0
        %v3290 = vpop.f32.mrb[0].mxu0
        %v3291 = vadd.f32 %v3083, %v3290
        %v3292 = vpop.f32.mrb[0].mxu0
        %3293 = vmatprep.mubr.bf16.mxu0 0
        %3294 = vmatmul.mubr.bf16.gmra.mrb[0].mxu0 %v3153
        %v3295 = vpop.f32.mrb[0].mxu0
        %v3296 = vadd.f32 %v3083, %v3295
        %v3297 = vpop.f32.mrb[0].mxu0
        %v3298 = vpop.f32.mrb[0].mxu0
        %v3299 = vadd.f32 %v3083, %v3298
        %v3300 = vpop.f32.mrb[0].mxu0
        %3301 = vmatprep.mubr.bf16.mxu0 0
        %3302 = vmatmul.mubr.bf16.gmra.mrb[0].mxu0 %v3154
        %v3303 = vpop.f32.mrb[0].mxu0
        %v3304 = vadd.f32 %v3083, %v3303
        %v3305 = vpop.f32.mrb[0].mxu0
        %v3306 = vpop.f32.mrb[0].mxu0
        %v3307 = vadd.f32 %v3083, %v3306
        %v3308 = vpop.f32.mrb[0].mxu0
        %3309 = vmatprep.mubr.bf16.mxu0 0
        %3310 = vmatmul.mubr.bf16.gmra.mrb[0].mxu0 %v3155
        %v3311 = vpop.f32.mrb[0].mxu0
        %v3312 = vadd.f32 %v3083, %v3311
        %v3313 = vpop.f32.mrb[0].mxu0
        %v3314 = vpop.f32.mrb[0].mxu0
        %v3315 = vadd.f32 %v3083, %v3314
        %v3316 = vpop.f32.mrb[0].mxu0
        %3317 = vmatprep.mubr.bf16.mxu0 0
        %3318 = vmatmul.mubr.bf16.gmra.mrb[0].mxu0 %v3156
        %v3319 = vpop.f32.mrb[0].mxu0
        %v3320 = vadd.f32 %v3083, %v3319
        %v3321 = vpop.f32.mrb[0].mxu0
        %v3322 = vpop.f32.mrb[0].mxu0
        %v3323 = vadd.f32 %v3083, %v3322
        %v3324 = vpop.f32.mrb[0].mxu0
        %3325 = vmatprep.mubr.bf16.mxu0 0
        %3326 = vmatmul.mubr.bf16.gmra.mrb[0].mxu0 %v3157
        %v3327 = vpop.f32.mrb[0].mxu0
        %v3328 = vadd.f32 %v3083, %v3327
        %v3329 = vpop.f32.mrb[0].mxu0
        %v3330 = vpop.f32.mrb[0].mxu0
        %v3331 = vadd.f32 %v3083, %v3330
        %v3332 = vpop.f32.mrb[0].mxu0
        %3333 = vmatprep.mubr.bf16.mxu0 0
        %3334 = vmatmul.mubr.bf16.gmra.mrb[0].mxu0 %v3158
        %v3335 = vpop.f32.mrb[0].mxu0
        %v3336 = vadd.f32 %v3083, %v3335
        %v3337 = vpop.f32.mrb[0].mxu0
        %v3338 = vpop.f32.mrb[0].mxu0
        %v3339 = vadd.f32 %v3083, %v3338
        %v3340 = vpop.f32.mrb[0].mxu0
        %3341 = vmatprep.mubr.bf16.mxu0 0
        %3342 = vmatmul.mubr.bf16.gmra.mrb[0].mxu0 %v3159
        %v3343 = vpop.f32.mrb[0].mxu0
        %v3344 = vadd.f32 %v3083, %v3343
        %v3345 = vpop.f32.mrb[0].mxu0
        %v3346 = vpop.f32.mrb[0].mxu0
        %v3347 = vadd.f32 %v3083, %v3346
        %v3348 = vpop.f32.mrb[0].mxu0
        %3349 = vmatprep.mubr.bf16.mxu0 0
        %3350 = vmatmul.mubr.bf16.gmra.mrb[0].mxu0 %v3160
        %v3351 = vpop.f32.mrb[0].mxu0
        %v3352 = vadd.f32 %v3083, %v3351
        %v3353 = vpop.f32.mrb[0].mxu0
        %v3354 = vpop.f32.mrb[0].mxu0
        %v3355 = vadd.f32 %v3083, %v3354
        %v3356 = vpop.f32.mrb[0].mxu0
        %3357 = vmatprep.mubr.bf16.mxu0 0
        %3358 = vmatmul.mubr.bf16.gmra.mrb[0].mxu0 %v3161
        %v3359 = vpop.f32.mrb[0].mxu0
        %v3360 = vadd.f32 %v3083, %v3359
        %v3361 = vpop.f32.mrb[0].mxu0
        %v3362 = vpop.f32.mrb[0].mxu0
        %v3363 = vadd.f32 %v3083, %v3362
        %v3364 = vpop.f32.mrb[0].mxu0
        %3365 = vmatprep.mubr.bf16.mxu0 0
        %3366 = vmatmul.mubr.bf16.gmra.mrb[0].mxu0 %v3162
        %v3367 = vpop.f32.mrb[0].mxu0
        %v3368 = vadd.f32 %v3083, %v3367
        %v3369 = vpop.f32.mrb[0].mxu0
        %v3370 = vpop.f32.mrb[0].mxu0
        %v3371 = vadd.f32 %v3083, %v3370
        %v3372 = vpop.f32.mrb[0].mxu0
        %3373 = vmatprep.mubr.bf16.mxu0 0
        %3374 = vmatmul.mubr.bf16.gmra.mrb[0].mxu0 %v3163
        %v3375 = vpop.f32.mrb[0].mxu0
        %v3376 = vadd.f32 %v3083, %v3375
        %v3377 = vpop.f32.mrb[0].mxu0
        %v3378 = vpop.f32.mrb[0].mxu0
        %v3379 = vadd.f32 %v3083, %v3378
        %v3380 = vpop.f32.mrb[0].mxu0
        %3381 = vmatprep.mubr.bf16.mxu0 0
        %3382 = vmatmul.mubr.bf16.gmra.mrb[0].mxu0 %v3164
        %v3383 = vpop.f32.mrb[0].mxu0
        %v3384 = vadd.f32 %v3083, %v3383
        %v3385 = vpop.f32.mrb[0].mxu0
        %v3386 = vpop.f32.mrb[0].mxu0
        %v3387 = vadd.f32 %v3083, %v3386
        %v3388 = vpop.f32.mrb[0].mxu0
        %3389 = vdwg.mxu0
        %v3390 = vmax.f32 %v3264, 0.0
        %v3391 = vmax.f32 %v3267, 0.0
        %v3392 = vmax.f32 %v3272, 0.0
        %v3393 = vmax.f32 %v3275, 0.0
        %v3394 = vmax.f32 %v3280, 0.0
        %v3395 = vmax.f32 %v3283, 0.0
        %v3396 = vmax.f32 %v3288, 0.0
        %v3397 = vmax.f32 %v3291, 0.0
        %v3398 = vmax.f32 %v3296, 0.0
        %v3399 = vmax.f32 %v3299, 0.0
        %v3400 = vmax.f32 %v3304, 0.0
        %v3401 = vmax.f32 %v3307, 0.0
        %v3402 = vmax.f32 %v3312, 0.0
        %v3403 = vmax.f32 %v3315, 0.0
        %v3404 = vmax.f32 %v3320, 0.0
        %v3405 = vmax.f32 %v3323, 0.0
        %v3406 = vmax.f32 %v3328, 0.0
        %v3407 = vmax.f32 %v3331, 0.0
        %v3408 = vmax.f32 %v3336, 0.0
        %v3409 = vmax.f32 %v3339, 0.0
        %v3410 = vmax.f32 %v3344, 0.0
        %v3411 = vmax.f32 %v3347, 0.0
        %v3412 = vmax.f32 %v3352, 0.0
        %v3413 = vmax.f32 %v3355, 0.0
        %v3414 = vmax.f32 %v3360, 0.0
        %v3415 = vmax.f32 %v3363, 0.0
        %v3416 = vmax.f32 %v3368, 0.0
        %v3417 = vmax.f32 %v3371, 0.0
        %v3418 = vmax.f32 %v3376, 0.0
        %v3419 = vmax.f32 %v3379, 0.0
        %v3420 = vmax.f32 %v3384, 0.0
        %v3421 = vmax.f32 %v3387, 0.0
        %3422 = vst [vmem:[%s231] sm:$0xff] %v3390
        %3423 = vst [vmem:[%s231 + $0x8] sm:$0xff] %v3391
        %3424 = vst [vmem:[%s231 + $0x10] sm:$0xff] %v3392
        %3425 = vst [vmem:[%s231 + $0x18] sm:$0xff] %v3393
        %3426 = vst [vmem:[%s231 + $0x20] sm:$0xff] %v3394
        %3427 = vst [vmem:[%s231 + $0x28] sm:$0xff] %v3395
        %3428 = vst [vmem:[%s231 + $0x30] sm:$0xff] %v3396
        %3429 = vst [vmem:[%s231 + $0x38] sm:$0xff] %v3397
        %3430 = vst [vmem:[%s231 + $0x40] sm:$0xff] %v3398
        %3431 = vst [vmem:[%s231 + $0x48] sm:$0xff] %v3399
        %3432 = vst [vmem:[%s231 + $0x50] sm:$0xff] %v3400
        %3433 = vst [vmem:[%s231 + $0x58] sm:$0xff] %v3401
        %3434 = vst [vmem:[%s231 + $0x60] sm:$0xff] %v3402
        %3435 = vst [vmem:[%s231 + $0x68] sm:$0xff] %v3403
        %3436 = vst [vmem:[%s231 + $0x70] sm:$0xff] %v3404
        %3437 = vst [vmem:[%s231 + $0x78] sm:$0xff] %v3405
        %3438 = vst [vmem:[%s231 + $0x80] sm:$0xff] %v3406
        %3439 = vst [vmem:[%s231 + $0x88] sm:$0xff] %v3407
        %3440 = vst [vmem:[%s231 + $0x90] sm:$0xff] %v3408
        %3441 = vst [vmem:[%s231 + $0x98] sm:$0xff] %v3409
        %3442 = vst [vmem:[%s231 + $0xa0] sm:$0xff] %v3410
        %3443 = vst [vmem:[%s231 + $0xa8] sm:$0xff] %v3411
        %3444 = vst [vmem:[%s231 + $0xb0] sm:$0xff] %v3412
        %3445 = vst [vmem:[%s231 + $0xb8] sm:$0xff] %v3413
        %3446 = vst [vmem:[%s231 + $0xc0] sm:$0xff] %v3414
        %3447 = vst [vmem:[%s231 + $0xc8] sm:$0xff] %v3415
        %3448 = vst [vmem:[%s231 + $0xd0] sm:$0xff] %v3416
        %3449 = vst [vmem:[%s231 + $0xd8] sm:$0xff] %v3417
        %3450 = vst [vmem:[%s231 + $0xe0] sm:$0xff] %v3418
        %3451 = vst [vmem:[%s231 + $0xe8] sm:$0xff] %v3419
        %3452 = vst [vmem:[%s231 + $0xf0] sm:$0xff] %v3420
        %3453 = vst [vmem:[%s231 + $0xf8] sm:$0xff] %v3421
        %s3454 = sand.u32 %s151, 1
        %s3455 = scalar_lea.sflag [#allocation3], %s3454
        %s3456 = sand.u32 %s151, 1
        %s3457 = smul.addr %s3456, 256
        %s3458 = scalar_lea.vmem [#allocation2], %s3457
        // Predicated region
        $region41: #{tpu_custom_call.1} parent=39 // pred_check
          %p3459 = pneg %p161
        $region42: #{tpu_custom_call.1} parent=39 // pred_check_branch
          %3461 = sbr.rel (%p3459) target = $region44
        $region43: #{tpu_custom_call.1} parent=39 // pred_region
          %s3462 = smul.u32 16, %s24
          %s3464 = ssub.s32 4096, 4096
          %3465 = vsyncadd %s3455, %s3464
          %s3466 = smul.addr %s3462, 2
          %s3467 = smul.addr %s23, 32
          %s3468 = sadd.s32 %s3466, %s3467
          %s3469 = smul.addr %s3468, 128
          %s3470 = scalar_lea.hbm %s5, %s3469
          %s3471 = sshll.u32 %s3458, 4
          %s3472 = int_to_ptr.vmem [resolvable:$true] %s3471
          %3477 = dma.vmem_to_hbm [thread:$0]  %s3472, 4096, %s3470, %s3455, 128, 128, 8
        $region44: #{tpu_custom_call.1} parent=39 // pred_fallthru
          _
      $region40: #{tpu_custom_call.1} parent=5 // pred_fallthru
        _
      %p3478 = scmp.le.s32.totalorder 2, %s14
      // Predicated region
      $region45: #{tpu_custom_call.1} parent=5 // pred_check
        %p3479 = pneg %p3478
      $region46: #{tpu_custom_call.1} parent=5 // pred_check_branch
        %3481 = sbr.rel (%p3479) target = $region48
      $region47: #{tpu_custom_call.1} parent=5 // pred_region
        %s3482 = ssub.s32 %s14, 2
        // Predicated region
        $region49: #{tpu_custom_call.1} parent=47 // pred_check
          %p3483 = pneg %p167
        $region50: #{tpu_custom_call.1} parent=47 // pred_check_branch
          %3485 = sbr.rel (%p3483) target = $region52
        $region51: #{tpu_custom_call.1} parent=47 // pred_region
          %s3486 = sand.u32 %s152, 1
          %s3487 = scalar_lea.sflag [#allocation3], %s3486
          %s3488 = sand.u32 %s152, 1
          %s3489 = smul.addr %s3488, 256
          %s3490 = scalar_lea.vmem [#allocation2], %s3489
          %3491 = dma.done %s3487, 4096
        $region52: #{tpu_custom_call.1} parent=47 // pred_fallthru
          _
      $region48: #{tpu_custom_call.1} parent=5 // pred_fallthru
        _
    $region6: #{tpu_custom_call.1} parent=1 // loop_footer
      %s18 = sadd.s32 1, %s14
    $region7: #{tpu_custom_call.1} parent=1 // loop_footer_branch
      %13 = sbr.rel target = $region3
    $region8: #{tpu_custom_call.1} parent=1 // loop_exit
      _
    %3492 = vsyncpa [#allocation3], 1
    %s3493 = scalar_lea.sflag [#allocation3], 1
    %3494 = vsyncpa %s3493, 1

</llo_original>
